<compile_context>
chip_gen: v7x
topology: tpu7x:2x2x1
jax: 0.10.0
libtpu: 0.0.40
codegen_flags: <defaults>
</compile_context>

<pallas_src>
import functools

import jax
import jax.numpy as jnp
from jax.experimental import pallas as pl
from jax.experimental.pallas import tpu as pltpu

_LANE = 128
_BF16_SUBLANE = 16


def _round_up(x, m):
    return ((x + m - 1) // m) * m


def _pad_gate_rows(w, h, h_pad):
    """(4*h, d) PyTorch-gate-ordered weight -> (4*h_pad, d), zero-padded per gate block."""
    if h_pad == h:
        return w
    d = w.shape[1]
    w4 = w.reshape(4, h, d)
    w4 = jnp.pad(w4, ((0, 0), (0, h_pad - h), (0, 0)))
    return w4.reshape(4 * h_pad, d)


def _pad_gate_vec(b, h, h_pad):
    """(4*h,) bias -> (4*h_pad,), zero-padded per gate block."""
    if h_pad == h:
        return b
    b4 = b.reshape(4, h)
    b4 = jnp.pad(b4, ((0, 0), (0, h_pad - h)))
    return b4.reshape(4 * h_pad)


def _full_block(shape):
    zeros = (0,) * len(shape)
    return pl.BlockSpec(tuple(shape), lambda *_: zeros)


# ----------------------------------------------------------------------------
# Fused kernel: in-kernel embedding gather (one-hot MXU dot) + stacked LSTM
# layers on persistent xh slabs + output Linear.  Gate order = PyTorch [i,f,g,o].
# ----------------------------------------------------------------------------
def _make_model_kernel(n_layers, hp, B_pad, V_pad, T, last_only):
    n_slabs = n_layers - 1

    def kernel(*refs):
        # ---- parse refs (inputs, output, scratch in pallas_call order) ----
        pos = 0
        ids_ref = refs[pos]; pos += 1            # (T, B_pad, 1) int32
        table_ref = refs[pos]; pos += 1          # (V_pad, 4*hp[0]) bf16, bias folded
        wh0_ref = refs[pos]; pos += 1            # (hp[0], 4*hp[0]) bf16
        wcat_refs, bcat_refs = [], []
        for _ in range(n_slabs):
            wcat_refs.append(refs[pos]); pos += 1    # (hp[l-1]+hp[l], 4*hp[l]) bf16
            bcat_refs.append(refs[pos]); pos += 1    # (1, 4*hp[l]) f32
        wout_ref = refs[pos]; pos += 1           # (hp[-1], C_pad) bf16
        bout_ref = refs[pos]; pos += 1           # (1, C_pad) f32
        out_ref = refs[pos]; pos += 1            # (B_pad, C_pad) or (T, B_pad, C_pad)
        slab_refs = []
        for _ in range(n_slabs):
            slab_refs.append(refs[pos]); pos += 1    # (B_pad, hp[l-1]+hp[l]) bf16
        h0_ref = None
        if n_layers == 1:
            h0_ref = refs[pos]; pos += 1             # (B_pad, hp[0]) bf16
        c_refs = []
        for _ in range(n_layers):
            c_refs.append(refs[pos]); pos += 1       # (B_pad, hp[l]) f32

        # ---- zero-init recurrent state (PyTorch default h0 = c0 = 0) ----
        for r in slab_refs:
            r[...] = jnp.zeros_like(r)
        if h0_ref is not None:
            h0_ref[...] = jnp.zeros_like(h0_ref)
        for r in c_refs:
            r[...] = jnp.zeros_like(r)

        # ---- loop-invariants hoisted out of the time loop ----
        bcat_vals = [b[...] for b in bcat_refs]
        bout_val = bout_ref[...]
        vocab_iota = jax.lax.broadcasted_iota(jnp.int32, (B_pad, V_pad), 1)

        def read_h(layer):
            # h_layer(t-1): layer 0's state lives in slab 1's first lanes,
            # layer l>=1's state lives in its own slab's second lane block.
            if n_layers == 1:
                return h0_ref[...]
            if layer == 0:
                return slab_refs[0][:, :hp[0]]
            return slab_refs[layer - 1][:, hp[layer - 1]:]

        def write_h(layer, h_bf16):
            if n_layers == 1:
                h0_ref[...] = h_bf16
                return
            if layer < n_layers - 1:                    # input slot of layer+1's slab
                slab_refs[layer][:, :hp[layer]] = h_bf16
            if layer >= 1:                              # recurrent slot of own slab
                slab_refs[layer - 1][:, hp[layer - 1]:] = h_bf16

        def lstm_cell(gates, layer):
            """f32 cell math; returns bf16 h (MXU operand for next dot)."""
            H = hp[layer]
            c = c_refs[layer][...]
            i_g = jax.nn.sigmoid(gates[:, 0 * H:1 * H])
            f_g = jax.nn.sigmoid(gates[:, 1 * H:2 * H])
            g_g = jnp.tanh(gates[:, 2 * H:3 * H])
            o_g = jax.nn.sigmoid(gates[:, 3 * H:4 * H])
            c_new = f_g * c + i_g * g_g
            h_new = o_g * jnp.tanh(c_new)
            c_refs[layer][...] = c_new
            return h_new.astype(jnp.bfloat16)

        # TODO(synk): wavefront-pipeline across layers (layer l at step t-l),
        # modest time-loop unroll, and MXU RHS staging (matmul_push_rhs) would
        # further hide MXU/EUP latency at small batch.
        @pl.loop(0, T)
        def _timestep(t):
            # Layer 0: in-kernel embedding gather as a one-hot MXU dot against
            # the folded (embedding @ W_ih0^T + b0) table.
            ids_col = ids_ref[t]                                     # (B_pad, 1) i32
            onehot = jnp.where(ids_col == vocab_iota, 1.0, 0.0
                               ).astype(jnp.bfloat16)                # (B_pad, V_pad)
            gates0 = (jnp.dot(onehot, table_ref[...],
                              preferred_element_type=jnp.float32)
                      + jnp.dot(read_h(0), wh0_ref[...],
                                preferred_element_type=jnp.float32))
            h = lstm_cell(gates0, 0)
            write_h(0, h)

            # Layers 1..n-1: one fused dot on the persistent [x_t, h_l] slab.
            for l in range(1, n_layers):
                gates = (jnp.dot(slab_refs[l - 1][...], wcat_refs[l - 1][...],
                                 preferred_element_type=jnp.float32)
                         + bcat_vals[l - 1])
                h = lstm_cell(gates, l)
                write_h(l, h)

            if not last_only:
                out_ref[t] = (jnp.dot(h, wout_ref[...],
                                      preferred_element_type=jnp.float32)
                              + bout_val).astype(out_ref.dtype)

        if last_only:
            # Output head hoisted out of the recurrence; the top layer's h(T-1)
            # is persistent in its slab / scratch.
            out_ref[...] = (jnp.dot(read_h(n_layers - 1), wout_ref[...],
                                    preferred_element_type=jnp.float32)
                            + bout_val).astype(out_ref.dtype)

    return kernel


# ----------------------------------------------------------------------------
# Parameter init (PyTorch nn.Embedding / nn.LSTM / nn.Linear style)
# ----------------------------------------------------------------------------
def init_params(key, no_characters, embedding_dim, no_layers, lstms_hidden,
                lstm_out):
    params = {}
    key, k_emb = jax.random.split(key)
    params["embedding"] = jax.random.normal(
        k_emb, (no_characters + 1, embedding_dim), jnp.float32)

    sizes = [embedding_dim] + [lstms_hidden] * no_layers + [lstm_out]
    lstm_params = []
    for d_in, d_out in zip(sizes[:-1], sizes[1:]):
        key, k1, k2, k3, k4 = jax.random.split(key, 5)
        k = 1.0 / jnp.sqrt(d_out)
        lstm_params.append(dict(
            w_ih=jax.random.uniform(k1, (4 * d_out, d_in), jnp.float32, -k, k),
            w_hh=jax.random.uniform(k2, (4 * d_out, d_out), jnp.float32, -k, k),
            b_ih=jax.random.uniform(k3, (4 * d_out,), jnp.float32, -k, k),
            b_hh=jax.random.uniform(k4, (4 * d_out,), jnp.float32, -k, k),
        ))
    params["lstms"] = lstm_params

    key, k_w, k_b = jax.random.split(key, 3)
    k = 1.0 / jnp.sqrt(lstm_out)
    params["out_w"] = jax.random.uniform(
        k_w, (no_characters, lstm_out), jnp.float32, -k, k)
    params["out_b"] = jax.random.uniform(
        k_b, (no_characters,), jnp.float32, -k, k)
    return params


# ----------------------------------------------------------------------------
# Full model forward
# ----------------------------------------------------------------------------
@functools.partial(jax.jit, static_argnames=("last_only",))
def character_language_model(params, X, last_only=True):
    """X: (B, T) int32 character indices -> (B, C) or (B, T, C) logits."""
    B, T = X.shape
    assert T >= 1

    lstms = params["lstms"]
    n_layers = len(lstms)
    hidden = [int(lp["w_hh"].shape[1]) for lp in lstms]
    hp = [_round_up(h, _LANE) for h in hidden]      # lane-aligned gate blocks

    B_pad = _round_up(B, _BF16_SUBLANE)             # bf16 sublane packing
    V = int(params["embedding"].shape[0])
    V_pad = _round_up(V, _LANE)
    C = int(params["out_w"].shape[0])
    C_pad = _round_up(C, _LANE)                     # lane-dense output store

    # Token ids, time-major, one id per (sublane) batch row.
    # TODO(synk): a (B_pad, T) layout + dynamic lane slice would shrink the ids
    # VMEM footprint (trailing size-1 dim pads to 128 lanes); leading-axis
    # dynamic indexing kept for robust lowering.
    Xp = jnp.pad(X.astype(jnp.int32), ((0, B_pad - B), (0, 0)))
    ids = Xp.T[:, :, None]                                          # (T, B_pad, 1)

    # ---- layer 0: fold embedding @ W_ih^T + (b_ih + b_hh) into one table ----
    lp0 = lstms[0]
    H0, H0p = hidden[0], hp[0]
    w_ih0 = _pad_gate_rows(lp0["w_ih"].astype(jnp.float32), H0, H0p)   # (4H0p, E)
    b0 = _pad_gate_vec((lp0["b_ih"] + lp0["b_hh"]).astype(jnp.float32), H0, H0p)
    table = params["embedding"].astype(jnp.float32) @ w_ih0.T + b0[None, :]
    table = jnp.pad(table, ((0, V_pad - V), (0, 0))).astype(jnp.bfloat16)

    w_hh0 = _pad_gate_rows(lp0["w_hh"].astype(jnp.float32), H0, H0p)   # (4H0p, H0)
    w_hh0 = jnp.pad(w_hh0, ((0, 0), (0, H0p - H0)))
    wh0_t = w_hh0.T.astype(jnp.bfloat16)                               # (H0p, 4H0p)

    args = [ids, table, wh0_t]

    # ---- layers 1..n-1: pre-transposed, gate-padded, concatenated weights ----
    for l in range(1, n_layers):
        lp = lstms[l]
        Hl, Hlp = hidden[l], hp[l]
        Hin, Hinp = hidden[l - 1], hp[l - 1]
        w_ih = _pad_gate_rows(lp["w_ih"].astype(jnp.float32), Hl, Hlp)
        w_ih = jnp.pad(w_ih, ((0, 0), (0, Hinp - Hin)))
        w_hh = _pad_gate_rows(lp["w_hh"].astype(jnp.float32), Hl, Hlp)
        w_hh = jnp.pad(w_hh, ((0, 0), (0, Hlp - Hl)))
        w_cat = jnp.concatenate([w_ih.T, w_hh.T], axis=0).astype(jnp.bfloat16)
        b_l = _pad_gate_vec((lp["b_ih"] + lp["b_hh"]).astype(jnp.float32), Hl, Hlp)
        args += [w_cat, b_l.reshape(1, 4 * Hlp)]

    # ---- output head (lane-padded classes) ----
    Hlast, Hlastp = hidden[-1], hp[-1]
    w_out = jnp.pad(params["out_w"].astype(jnp.float32),
                    ((0, C_pad - C), (0, Hlastp - Hlast)))
    wout_t = w_out.T.astype(jnp.bfloat16)                              # (Hlastp, C_pad)
    bout = jnp.pad(params["out_b"].astype(jnp.float32),
                   (0, C_pad - C)).reshape(1, C_pad)
    args += [wout_t, bout]

    out_shape = (B_pad, C_pad) if last_only else (T, B_pad, C_pad)

    scratch = []
    for l in range(1, n_layers):
        scratch.append(pltpu.VMEM((B_pad, hp[l - 1] + hp[l]), jnp.bfloat16))
    if n_layers == 1:
        scratch.append(pltpu.VMEM((B_pad, hp[0]), jnp.bfloat16))
    for l in range(n_layers):
        scratch.append(pltpu.VMEM((B_pad, hp[l]), jnp.float32))

    kernel = _make_model_kernel(n_layers, hp, B_pad, V_pad, T, last_only)

    # TODO(synk): on v7x, split the batch across the two TensorCores with a
    # leading 'parallel' grid axis (B_pad >= 32) for ~2x; no-op on v5e/v6e.
    out = pl.pallas_call(
        kernel,
        out_shape=jax.ShapeDtypeStruct(out_shape, jnp.float32),
        in_specs=[_full_block(a.shape) for a in args],
        out_specs=_full_block(out_shape),
        scratch_shapes=scratch,
        compiler_params=pltpu.CompilerParams(
            vmem_limit_bytes=48 * 1024 * 1024),
    )(*args)

    if last_only:
        return out[:B, :C]
    return jnp.transpose(out, (1, 0, 2))[:B, :, :C]      # back to batch_first


# ----------------------------------------------------------------------------
# Pure-JAX reference (PyTorch semantics) for a correctness check
# ----------------------------------------------------------------------------
def _reference_forward(params, X, last_only=True):
    x = jnp.take(params["embedding"], X, axis=0)            # (B, T, E)
    for lp in params["lstms"]:
        B, T, _ = x.shape
        H = lp["w_hh"].shape[1]
        h = jnp.zeros((B, H), jnp.float32)
        c = jnp.zeros((B, H), jnp.float32)
        outs = []
        for t in range(T):
            g = (x[:, t] @ lp["w_ih"].T + h @ lp["w_hh"].T
                 + lp["b_ih"] + lp["b_hh"])
            i = jax.nn.sigmoid(g[:, :H])
            f = jax.nn.sigmoid(g[:, H:2 * H])
            gg = jnp.tanh(g[:, 2 * H:3 * H])
            o = jax.nn.sigmoid(g[:, 3 * H:4 * H])
            c = f * c + i * gg
            h = o * jnp.tanh(c)
            outs.append(h)
        x = jnp.stack(outs, axis=1)
    if last_only:
        return x[:, -1] @ params["out_w"].T + params["out_b"]
    B, T, H = x.shape
    return (x.reshape(B * T, H) @ params["out_w"].T
            + params["out_b"]).reshape(B, T, -1)


if __name__ == "__main__":
    no_characters = 10
    embedding_dim = 8
    no_layers = 2
    lstms_hidden = 16
    lstm_out = 16
    batch, seq = 2, 8

    key = jax.random.PRNGKey(0)
    key, k_params, k_x = jax.random.split(key, 3)
    params = init_params(k_params, no_characters, embedding_dim, no_layers,
                         lstms_hidden, lstm_out)
    X = jax.random.randint(k_x, (batch, seq), 0, no_characters + 1, jnp.int32)

    logits = character_language_model(params, X, last_only=True)
    jax.block_until_ready(logits)
    assert logits.shape == (batch, no_characters)
    assert bool(jnp.all(jnp.isfinite(logits)))

    ref = _reference_forward(params, X, last_only=True)
    assert bool(jnp.allclose(logits, ref, atol=5e-2, rtol=5e-2)), (
        "max abs diff vs reference: "
        f"{float(jnp.max(jnp.abs(logits - ref)))}")

    print("KERNEL_OK")
</pallas_src>

<mosaic_0001>
module attributes {stable_mosaic.version = 11 : i64} {
  func.func @kernel(%arg0: memref<8x16x1xi32, #tpu.memory_space<vmem>>, %arg1: memref<128x512xbf16, #tpu.memory_space<vmem>>, %arg2: memref<128x512xbf16, #tpu.memory_space<vmem>>, %arg3: memref<256x512xbf16, #tpu.memory_space<vmem>>, %arg4: memref<1x512xf32, #tpu.memory_space<vmem>>, %arg5: memref<256x512xbf16, #tpu.memory_space<vmem>>, %arg6: memref<1x512xf32, #tpu.memory_space<vmem>>, %arg7: memref<128x128xbf16, #tpu.memory_space<vmem>>, %arg8: memref<1x128xf32, #tpu.memory_space<vmem>>, %arg9: memref<16x128xf32, #tpu.memory_space<vmem>>, %arg10: memref<16x256xbf16, #tpu.memory_space<vmem>>, %arg11: memref<16x256xbf16, #tpu.memory_space<vmem>>, %arg12: memref<16x128xf32, #tpu.memory_space<vmem>>, %arg13: memref<16x128xf32, #tpu.memory_space<vmem>>, %arg14: memref<16x128xf32, #tpu.memory_space<vmem>>) attributes {dimension_semantics = [], scalar_prefetch = 0 : i64, scratch_operands = 5 : i64, tpu.core_type = #tpu.core_type<tc>} {
    %cst = arith.constant 0.000000e+00 : bf16
    %0 = vector.broadcast %cst : bf16 to vector<16x256xbf16>
    %c0 = arith.constant 0 : index
    %c0_0 = arith.constant 0 : index
    %1 = vector.load %arg10[%c0, %c0_0] : memref<16x256xbf16, #tpu.memory_space<vmem>>, vector<16x256xbf16>
    tpu.vector_store %arg10[%c0, %c0_0], %0 {strides = array<i32>} : memref<16x256xbf16, #tpu.memory_space<vmem>>, vector<16x256xbf16>,
    %cst_1 = arith.constant 0.000000e+00 : bf16
    %2 = vector.broadcast %cst_1 : bf16 to vector<16x256xbf16>
    %c0_2 = arith.constant 0 : index
    %c0_3 = arith.constant 0 : index
    %3 = vector.load %arg11[%c0_2, %c0_3] : memref<16x256xbf16, #tpu.memory_space<vmem>>, vector<16x256xbf16>
    tpu.vector_store %arg11[%c0_2, %c0_3], %2 {strides = array<i32>} : memref<16x256xbf16, #tpu.memory_space<vmem>>, vector<16x256xbf16>,
    %cst_4 = arith.constant 0.000000e+00 : f32
    %4 = vector.broadcast %cst_4 : f32 to vector<16x128xf32>
    %c0_5 = arith.constant 0 : index
    %c0_6 = arith.constant 0 : index
    %5 = vector.load %arg12[%c0_5, %c0_6] : memref<16x128xf32, #tpu.memory_space<vmem>>, vector<16x128xf32>
    tpu.vector_store %arg12[%c0_5, %c0_6], %4 {strides = array<i32>} : memref<16x128xf32, #tpu.memory_space<vmem>>, vector<16x128xf32>,
    %cst_7 = arith.constant 0.000000e+00 : f32
    %6 = vector.broadcast %cst_7 : f32 to vector<16x128xf32>
    %c0_8 = arith.constant 0 : index
    %c0_9 = arith.constant 0 : index
    %7 = vector.load %arg13[%c0_8, %c0_9] : memref<16x128xf32, #tpu.memory_space<vmem>>, vector<16x128xf32>
    tpu.vector_store %arg13[%c0_8, %c0_9], %6 {strides = array<i32>} : memref<16x128xf32, #tpu.memory_space<vmem>>, vector<16x128xf32>,
    %cst_10 = arith.constant 0.000000e+00 : f32
    %8 = vector.broadcast %cst_10 : f32 to vector<16x128xf32>
    %c0_11 = arith.constant 0 : index
    %c0_12 = arith.constant 0 : index
    %9 = vector.load %arg14[%c0_11, %c0_12] : memref<16x128xf32, #tpu.memory_space<vmem>>, vector<16x128xf32>
    tpu.vector_store %arg14[%c0_11, %c0_12], %8 {strides = array<i32>} : memref<16x128xf32, #tpu.memory_space<vmem>>, vector<16x128xf32>,
    %c0_13 = arith.constant 0 : index
    %c0_14 = arith.constant 0 : index
    %10 = vector.load %arg4[%c0_13, %c0_14] : memref<1x512xf32, #tpu.memory_space<vmem>>, vector<1x512xf32>
    %c0_15 = arith.constant 0 : index
    %c0_16 = arith.constant 0 : index
    %11 = vector.load %arg6[%c0_15, %c0_16] : memref<1x512xf32, #tpu.memory_space<vmem>>, vector<1x512xf32>
    %c0_17 = arith.constant 0 : index
    %c0_18 = arith.constant 0 : index
    %12 = vector.load %arg8[%c0_17, %c0_18] : memref<1x128xf32, #tpu.memory_space<vmem>>, vector<1x128xf32>
    %13 = tpu.iota {dimensions = array<i32: 1>} : vector<16x128xi32>
    %c0_i32 = arith.constant 0 : i32
    %c8_i32 = arith.constant 8 : i32
    %14 = arith.addi %c0_i32, %c8_i32 : i32
    %c1_i32 = arith.constant 1 : i32
    scf.for %arg15 = %c0_i32 to %14 step %c1_i32  : i32 {
      %c1_i32_26 = arith.constant 1 : i32
      %21 = arith.muli %arg15, %c1_i32_26 : i32
      %c0_i32_27 = arith.constant 0 : i32
      %22 = arith.addi %c0_i32_27, %21 : i32
      %23 = arith.index_cast %22 : i32 to index
      %c0_28 = arith.constant 0 : index
      %c0_29 = arith.constant 0 : index
      %24 = vector.load %arg0[%23, %c0_28, %c0_29] : memref<8x16x1xi32, #tpu.memory_space<vmem>>, vector<1x16x1xi32>
      %25 = vector.shape_cast %24 : vector<1x16x1xi32> to vector<16x1xi32>
      %26 = vector.broadcast %25 : vector<16x1xi32> to vector<16x128xi32>
      %27 = arith.cmpi eq, %26, %13 : vector<16x128xi32>
      %cst_30 = arith.constant 1.000000e+00 : f32
      %cst_31 = arith.constant 0.000000e+00 : f32
      %28 = vector.broadcast %cst_30 : f32 to vector<16x128xf32>
      %29 = vector.broadcast %cst_31 : f32 to vector<16x128xf32>
      %30 = arith.select %27, %28, %29 : vector<16x128xi1>, vector<16x128xf32>
      %31 = arith.truncf %30 : vector<16x128xf32> to vector<16x128xbf16>
      %c0_32 = arith.constant 0 : index
      %c0_33 = arith.constant 0 : index
      %32 = vector.load %arg1[%c0_32, %c0_33] : memref<128x512xbf16, #tpu.memory_space<vmem>>, vector<128x512xbf16>
      %cst_34 = arith.constant dense<0.000000e+00> : vector<16x512xf32>
      %33 = tpu.matmul %31, %32, %cst_34 {dimension_numbers = #tpu.dot_dimension_numbers<[1], [0], [0], [1], [0, 0, 1, 1], [], []>} : vector<16x128xbf16>, vector<128x512xbf16>, vector<16x512xf32> -> vector<16x512xf32>
      %c0_35 = arith.constant 0 : index
      %c0_36 = arith.constant 0 : index
      %34 = vector.load %arg10[%c0_35, %c0_36] : memref<16x256xbf16, #tpu.memory_space<vmem>>, vector<16x128xbf16>
      %c0_37 = arith.constant 0 : index
      %c0_38 = arith.constant 0 : index
      %35 = vector.load %arg2[%c0_37, %c0_38] : memref<128x512xbf16, #tpu.memory_space<vmem>>, vector<128x512xbf16>
      %cst_39 = arith.constant dense<0.000000e+00> : vector<16x512xf32>
      %36 = tpu.matmul %34, %35, %cst_39 {dimension_numbers = #tpu.dot_dimension_numbers<[1], [0], [0], [1], [0, 0, 1, 1], [], []>} : vector<16x128xbf16>, vector<128x512xbf16>, vector<16x512xf32> -> vector<16x512xf32>
      %37 = arith.addf %33, %36 : vector<16x512xf32>
      %c0_40 = arith.constant 0 : index
      %c0_41 = arith.constant 0 : index
      %38 = vector.load %arg12[%c0_40, %c0_41] : memref<16x128xf32, #tpu.memory_space<vmem>>, vector<16x128xf32>
      %39 = vector.extract_strided_slice %37 {offsets = [0, 0], sizes = [16, 128], strides = [1, 1]} : vector<16x512xf32> to vector<16x128xf32>
      %40 = arith.negf %39 : vector<16x128xf32>
      %41 = math.exp %40 : vector<16x128xf32>
      %cst_42 = arith.constant 1.000000e+00 : f32
      %42 = vector.broadcast %cst_42 : f32 to vector<16x128xf32>
      %43 = arith.addf %42, %41 : vector<16x128xf32>
      %44 = arith.divf %42, %43 : vector<16x128xf32>
      %45 = vector.extract_strided_slice %37 {offsets = [0, 128], sizes = [16, 128], strides = [1, 1]} : vector<16x512xf32> to vector<16x128xf32>
      %46 = arith.negf %45 : vector<16x128xf32>
      %47 = math.exp %46 : vector<16x128xf32>
      %cst_43 = arith.constant 1.000000e+00 : f32
      %48 = vector.broadcast %cst_43 : f32 to vector<16x128xf32>
      %49 = arith.addf %48, %47 : vector<16x128xf32>
      %50 = arith.divf %48, %49 : vector<16x128xf32>
      %51 = vector.extract_strided_slice %37 {offsets = [0, 256], sizes = [16, 128], strides = [1, 1]} : vector<16x512xf32> to vector<16x128xf32>
      %52 = math.tanh %51 : vector<16x128xf32>
      %53 = vector.extract_strided_slice %37 {offsets = [0, 384], sizes = [16, 128], strides = [1, 1]} : vector<16x512xf32> to vector<16x128xf32>
      %54 = arith.negf %53 : vector<16x128xf32>
      %55 = math.exp %54 : vector<16x128xf32>
      %cst_44 = arith.constant 1.000000e+00 : f32
      %56 = vector.broadcast %cst_44 : f32 to vector<16x128xf32>
      %57 = arith.addf %56, %55 : vector<16x128xf32>
      %58 = arith.divf %56, %57 : vector<16x128xf32>
      %59 = arith.mulf %50, %38 : vector<16x128xf32>
      %60 = arith.mulf %44, %52 : vector<16x128xf32>
      %61 = arith.addf %59, %60 : vector<16x128xf32>
      %62 = math.tanh %61 : vector<16x128xf32>
      %63 = arith.mulf %58, %62 : vector<16x128xf32>
      %c0_45 = arith.constant 0 : index
      %c0_46 = arith.constant 0 : index
      %64 = vector.load %arg12[%c0_45, %c0_46] : memref<16x128xf32, #tpu.memory_space<vmem>>, vector<16x128xf32>
      tpu.vector_store %arg12[%c0_45, %c0_46], %61 {strides = array<i32>} : memref<16x128xf32, #tpu.memory_space<vmem>>, vector<16x128xf32>,
      %65 = arith.truncf %63 : vector<16x128xf32> to vector<16x128xbf16>
      %c0_47 = arith.constant 0 : index
      %c0_48 = arith.constant 0 : index
      %66 = vector.load %arg10[%c0_47, %c0_48] : memref<16x256xbf16, #tpu.memory_space<vmem>>, vector<16x128xbf16>
      tpu.vector_store %arg10[%c0_47, %c0_48], %65 {strides = array<i32>} : memref<16x256xbf16, #tpu.memory_space<vmem>>, vector<16x128xbf16>,
      %c0_49 = arith.constant 0 : index
      %c0_50 = arith.constant 0 : index
      %67 = vector.load %arg10[%c0_49, %c0_50] : memref<16x256xbf16, #tpu.memory_space<vmem>>, vector<16x256xbf16>
      %c0_51 = arith.constant 0 : index
      %c0_52 = arith.constant 0 : index
      %68 = vector.load %arg3[%c0_51, %c0_52] : memref<256x512xbf16, #tpu.memory_space<vmem>>, vector<256x512xbf16>
      %cst_53 = arith.constant dense<0.000000e+00> : vector<16x512xf32>
      %69 = tpu.matmul %67, %68, %cst_53 {dimension_numbers = #tpu.dot_dimension_numbers<[1], [0], [0], [1], [0, 0, 1, 1], [], []>} : vector<16x256xbf16>, vector<256x512xbf16>, vector<16x512xf32> -> vector<16x512xf32>
      %70 = vector.broadcast %10 : vector<1x512xf32> to vector<16x512xf32>
      %71 = arith.addf %69, %70 : vector<16x512xf32>
      %c0_54 = arith.constant 0 : index
      %c0_55 = arith.constant 0 : index
      %72 = vector.load %arg13[%c0_54, %c0_55] : memref<16x128xf32, #tpu.memory_space<vmem>>, vector<16x128xf32>
      %73 = vector.extract_strided_slice %71 {offsets = [0, 0], sizes = [16, 128], strides = [1, 1]} : vector<16x512xf32> to vector<16x128xf32>
      %74 = arith.negf %73 : vector<16x128xf32>
      %75 = math.exp %74 : vector<16x128xf32>
      %cst_56 = arith.constant 1.000000e+00 : f32
      %76 = vector.broadcast %cst_56 : f32 to vector<16x128xf32>
      %77 = arith.addf %76, %75 : vector<16x128xf32>
      %78 = arith.divf %76, %77 : vector<16x128xf32>
      %79 = vector.extract_strided_slice %71 {offsets = [0, 128], sizes = [16, 128], strides = [1, 1]} : vector<16x512xf32> to vector<16x128xf32>
      %80 = arith.negf %79 : vector<16x128xf32>
      %81 = math.exp %80 : vector<16x128xf32>
      %cst_57 = arith.constant 1.000000e+00 : f32
      %82 = vector.broadcast %cst_57 : f32 to vector<16x128xf32>
      %83 = arith.addf %82, %81 : vector<16x128xf32>
      %84 = arith.divf %82, %83 : vector<16x128xf32>
      %85 = vector.extract_strided_slice %71 {offsets = [0, 256], sizes = [16, 128], strides = [1, 1]} : vector<16x512xf32> to vector<16x128xf32>
      %86 = math.tanh %85 : vector<16x128xf32>
      %87 = vector.extract_strided_slice %71 {offsets = [0, 384], sizes = [16, 128], strides = [1, 1]} : vector<16x512xf32> to vector<16x128xf32>
      %88 = arith.negf %87 : vector<16x128xf32>
      %89 = math.exp %88 : vector<16x128xf32>
      %cst_58 = arith.constant 1.000000e+00 : f32
      %90 = vector.broadcast %cst_58 : f32 to vector<16x128xf32>
      %91 = arith.addf %90, %89 : vector<16x128xf32>
      %92 = arith.divf %90, %91 : vector<16x128xf32>
      %93 = arith.mulf %84, %72 : vector<16x128xf32>
      %94 = arith.mulf %78, %86 : vector<16x128xf32>
      %95 = arith.addf %93, %94 : vector<16x128xf32>
      %96 = math.tanh %95 : vector<16x128xf32>
      %97 = arith.mulf %92, %96 : vector<16x128xf32>
      %c0_59 = arith.constant 0 : index
      %c0_60 = arith.constant 0 : index
      %98 = vector.load %arg13[%c0_59, %c0_60] : memref<16x128xf32, #tpu.memory_space<vmem>>, vector<16x128xf32>
      tpu.vector_store %arg13[%c0_59, %c0_60], %95 {strides = array<i32>} : memref<16x128xf32, #tpu.memory_space<vmem>>, vector<16x128xf32>,
      %99 = arith.truncf %97 : vector<16x128xf32> to vector<16x128xbf16>
      %c0_61 = arith.constant 0 : index
      %c0_62 = arith.constant 0 : index
      %100 = vector.load %arg11[%c0_61, %c0_62] : memref<16x256xbf16, #tpu.memory_space<vmem>>, vector<16x128xbf16>
      tpu.vector_store %arg11[%c0_61, %c0_62], %99 {strides = array<i32>} : memref<16x256xbf16, #tpu.memory_space<vmem>>, vector<16x128xbf16>,
      %c0_63 = arith.constant 0 : index
      %c128_64 = arith.constant 128 : index
      %101 = vector.load %arg10[%c0_63, %c128_64] : memref<16x256xbf16, #tpu.memory_space<vmem>>, vector<16x128xbf16>
      tpu.vector_store %arg10[%c0_63, %c128_64], %99 {strides = array<i32>} : memref<16x256xbf16, #tpu.memory_space<vmem>>, vector<16x128xbf16>,
      %c0_65 = arith.constant 0 : index
      %c0_66 = arith.constant 0 : index
      %102 = vector.load %arg11[%c0_65, %c0_66] : memref<16x256xbf16, #tpu.memory_space<vmem>>, vector<16x256xbf16>
      %c0_67 = arith.constant 0 : index
      %c0_68 = arith.constant 0 : index
      %103 = vector.load %arg5[%c0_67, %c0_68] : memref<256x512xbf16, #tpu.memory_space<vmem>>, vector<256x512xbf16>
      %cst_69 = arith.constant dense<0.000000e+00> : vector<16x512xf32>
      %104 = tpu.matmul %102, %103, %cst_69 {dimension_numbers = #tpu.dot_dimension_numbers<[1], [0], [0], [1], [0, 0, 1, 1], [], []>} : vector<16x256xbf16>, vector<256x512xbf16>, vector<16x512xf32> -> vector<16x512xf32>
      %105 = vector.broadcast %11 : vector<1x512xf32> to vector<16x512xf32>
      %106 = arith.addf %104, %105 : vector<16x512xf32>
      %c0_70 = arith.constant 0 : index
      %c0_71 = arith.constant 0 : index
      %107 = vector.load %arg14[%c0_70, %c0_71] : memref<16x128xf32, #tpu.memory_space<vmem>>, vector<16x128xf32>
      %108 = vector.extract_strided_slice %106 {offsets = [0, 0], sizes = [16, 128], strides = [1, 1]} : vector<16x512xf32> to vector<16x128xf32>
      %109 = arith.negf %108 : vector<16x128xf32>
      %110 = math.exp %109 : vector<16x128xf32>
      %cst_72 = arith.constant 1.000000e+00 : f32
      %111 = vector.broadcast %cst_72 : f32 to vector<16x128xf32>
      %112 = arith.addf %111, %110 : vector<16x128xf32>
      %113 = arith.divf %111, %112 : vector<16x128xf32>
      %114 = vector.extract_strided_slice %106 {offsets = [0, 128], sizes = [16, 128], strides = [1, 1]} : vector<16x512xf32> to vector<16x128xf32>
      %115 = arith.negf %114 : vector<16x128xf32>
      %116 = math.exp %115 : vector<16x128xf32>
      %cst_73 = arith.constant 1.000000e+00 : f32
      %117 = vector.broadcast %cst_73 : f32 to vector<16x128xf32>
      %118 = arith.addf %117, %116 : vector<16x128xf32>
      %119 = arith.divf %117, %118 : vector<16x128xf32>
      %120 = vector.extract_strided_slice %106 {offsets = [0, 256], sizes = [16, 128], strides = [1, 1]} : vector<16x512xf32> to vector<16x128xf32>
      %121 = math.tanh %120 : vector<16x128xf32>
      %122 = vector.extract_strided_slice %106 {offsets = [0, 384], sizes = [16, 128], strides = [1, 1]} : vector<16x512xf32> to vector<16x128xf32>
      %123 = arith.negf %122 : vector<16x128xf32>
      %124 = math.exp %123 : vector<16x128xf32>
      %cst_74 = arith.constant 1.000000e+00 : f32
      %125 = vector.broadcast %cst_74 : f32 to vector<16x128xf32>
      %126 = arith.addf %125, %124 : vector<16x128xf32>
      %127 = arith.divf %125, %126 : vector<16x128xf32>
      %128 = arith.mulf %119, %107 : vector<16x128xf32>
      %129 = arith.mulf %113, %121 : vector<16x128xf32>
      %130 = arith.addf %128, %129 : vector<16x128xf32>
      %131 = math.tanh %130 : vector<16x128xf32>
      %132 = arith.mulf %127, %131 : vector<16x128xf32>
      %c0_75 = arith.constant 0 : index
      %c0_76 = arith.constant 0 : index
      %133 = vector.load %arg14[%c0_75, %c0_76] : memref<16x128xf32, #tpu.memory_space<vmem>>, vector<16x128xf32>
      tpu.vector_store %arg14[%c0_75, %c0_76], %130 {strides = array<i32>} : memref<16x128xf32, #tpu.memory_space<vmem>>, vector<16x128xf32>,
      %134 = arith.truncf %132 : vector<16x128xf32> to vector<16x128xbf16>
      %c0_77 = arith.constant 0 : index
      %c128_78 = arith.constant 128 : index
      %135 = vector.load %arg11[%c0_77, %c128_78] : memref<16x256xbf16, #tpu.memory_space<vmem>>, vector<16x128xbf16>
      tpu.vector_store %arg11[%c0_77, %c128_78], %134 {strides = array<i32>} : memref<16x256xbf16, #tpu.memory_space<vmem>>, vector<16x128xbf16>,
    }
    %c8_i32_19 = arith.constant 8 : i32
    %c0_20 = arith.constant 0 : index
    %c128 = arith.constant 128 : index
    %15 = vector.load %arg11[%c0_20, %c128] : memref<16x256xbf16, #tpu.memory_space<vmem>>, vector<16x128xbf16>
    %c0_21 = arith.constant 0 : index
    %c0_22 = arith.constant 0 : index
    %16 = vector.load %arg7[%c0_21, %c0_22] : memref<128x128xbf16, #tpu.memory_space<vmem>>, vector<128x128xbf16>
    %cst_23 = arith.constant dense<0.000000e+00> : vector<16x128xf32>
    %17 = tpu.matmul %15, %16, %cst_23 {dimension_numbers = #tpu.dot_dimension_numbers<[1], [0], [0], [1], [0, 0, 1, 1], [], []>} : vector<16x128xbf16>, vector<128x128xbf16>, vector<16x128xf32> -> vector<16x128xf32>
    %18 = vector.broadcast %12 : vector<1x128xf32> to vector<16x128xf32>
    %19 = arith.addf %17, %18 : vector<16x128xf32>
    %c0_24 = arith.constant 0 : index
    %c0_25 = arith.constant 0 : index
    %20 = vector.load %arg9[%c0_24, %c0_25] : memref<16x128xf32, #tpu.memory_space<vmem>>, vector<16x128xf32>
    tpu.vector_store %arg9[%c0_24, %c0_25], %19 {strides = array<i32>} : memref<16x128xf32, #tpu.memory_space<vmem>>, vector<16x128xf32>,
    return
  }
}

</mosaic_0001>

<llo_original>
// kernel: character_language_model.1
$region0: #{character_language_model.1}
  #allocation0 [shape = 'u32[]', space=smem, size = 0x4, offset = 0x4, fixed_abs, tag = 'smem constant byte address 0x4 - core index']
  #allocation1 [shape = 'u32[144,128]{1,0:T(1,128)}', space=vmem, size = 0x12000, scoped, tag = 'internal scratch']
  #allocation2 [shape = 'bf16[16,256]{1,0:T(16,128)(2,1)}', space=vmem, size = 0x2000, scoped, tag = 'scratch operand']
  #allocation3 [shape = 'bf16[16,256]{1,0:T(16,128)(2,1)}', space=vmem, size = 0x2000, scoped, tag = 'scratch operand']
  #allocation4 [shape = 'f32[16,128]{1,0:T(8,128)}', space=vmem, size = 0x2000, scoped, tag = 'scratch operand']
  #allocation5 [shape = 'f32[16,128]{1,0:T(8,128)}', space=vmem, size = 0x2000, scoped, tag = 'scratch operand']
  #allocation6 [shape = 'f32[16,128]{1,0:T(8,128)}', space=vmem, size = 0x2000, scoped, tag = 'scratch operand']
  %s0 = inlined_call_operand.vmem [shape: s32[8,16,1], index: 0, kind: input, shape index: {}]
  %s1 = inlined_call_operand.vmem [shape: bf16[128,512], index: 1, kind: input, shape index: {}]
  %s2 = inlined_call_operand.vmem [shape: bf16[128,512], index: 2, kind: input, shape index: {}]
  %s3 = inlined_call_operand.vmem [shape: bf16[256,512], index: 3, kind: input, shape index: {}]
  %s4 = inlined_call_operand.vmem [shape: f32[1,512], index: 4, kind: input, shape index: {}]
  %s5 = inlined_call_operand.vmem [shape: bf16[256,512], index: 5, kind: input, shape index: {}]
  %s6 = inlined_call_operand.vmem [shape: f32[1,512], index: 6, kind: input, shape index: {}]
  %s7 = inlined_call_operand.vmem [shape: bf16[128,128], index: 7, kind: input, shape index: {}]
  %s8 = inlined_call_operand.vmem [shape: f32[1,128], index: 8, kind: input, shape index: {}]
  %s9 = inlined_call_operand.vmem [shape: f32[16,128], index: 9, kind: output, shape index: {}]
  %s10 = sld [smem:[#allocation0]]
  $region53: #{character_language_model.1} parent=0
    _
  %s12 = ssub.s32 1, %s10
  %s13 = scalar_select 0, %s12, %s10
  // Predicated region
  $region2: #{character_language_model.1} parent=0 // pred_check
    _
  $region3: #{character_language_model.1} parent=0 // pred_check_branch
    %15 = sbr.rel (0) target = $region5
  $region4: #{character_language_model.1} parent=0 // pred_region
    _
  $region5: #{character_language_model.1} parent=0 // pred_fallthru
    _
  // Predicated region
  $region6: #{character_language_model.1} parent=0 // pred_check
    _
  $region7: #{character_language_model.1} parent=0 // pred_check_branch
    %17 = sbr.rel (0) target = $region9
  $region8: #{character_language_model.1} parent=0 // pred_region
    _
  $region9: #{character_language_model.1} parent=0 // pred_fallthru
    _
  // Predicated region
  $region10: #{character_language_model.1} parent=0 // pred_check
    _
  $region11: #{character_language_model.1} parent=0 // pred_check_branch
    %19 = sbr.rel (0) target = $region13
  $region12: #{character_language_model.1} parent=0 // pred_region
    _
  $region13: #{character_language_model.1} parent=0 // pred_fallthru
    _
  // Predicated region
  $region14: #{character_language_model.1} parent=0 // pred_check
    _
  $region15: #{character_language_model.1} parent=0 // pred_check_branch
    %21 = sbr.rel (0) target = $region17
  $region16: #{character_language_model.1} parent=0 // pred_region
    _
  $region17: #{character_language_model.1} parent=0 // pred_fallthru
    _
  // Predicated region
  $region18: #{character_language_model.1} parent=0 // pred_check
    _
  $region19: #{character_language_model.1} parent=0 // pred_check_branch
    %23 = sbr.rel (0) target = $region21
  $region20: #{character_language_model.1} parent=0 // pred_region
    _
  $region21: #{character_language_model.1} parent=0 // pred_fallthru
    _
  // Predicated region
  $region22: #{character_language_model.1} parent=0 // pred_check
    _
  $region23: #{character_language_model.1} parent=0 // pred_check_branch
    %25 = sbr.rel (0) target = $region25
  $region24: #{character_language_model.1} parent=0 // pred_region
    _
  $region25: #{character_language_model.1} parent=0 // pred_fallthru
    _
  // Predicated region
  $region26: #{character_language_model.1} parent=0 // pred_check
    _
  $region27: #{character_language_model.1} parent=0 // pred_check_branch
    %27 = sbr.rel (0) target = $region29
  $region28: #{character_language_model.1} parent=0 // pred_region
    _
  $region29: #{character_language_model.1} parent=0 // pred_fallthru
    _
  // Predicated region
  $region30: #{character_language_model.1} parent=0 // pred_check
    _
  $region31: #{character_language_model.1} parent=0 // pred_check_branch
    %29 = sbr.rel (0) target = $region33
  $region32: #{character_language_model.1} parent=0 // pred_region
    _
  $region33: #{character_language_model.1} parent=0 // pred_fallthru
    _
  // Predicated region
  $region34: #{character_language_model.1} parent=0 // pred_check
    _
  $region35: #{character_language_model.1} parent=0 // pred_check_branch
    %31 = sbr.rel (0) target = $region37
  $region36: #{character_language_model.1} parent=0 // pred_region
    _
  $region37: #{character_language_model.1} parent=0 // pred_fallthru
    _
  %33 = vst [vmem:[#allocation2] sm:$0xff] 0
  %34 = vst [vmem:[#allocation2 + $0x8] sm:$0xff] 0
  %35 = vst [vmem:[#allocation3] sm:$0xff] 0
  %36 = vst [vmem:[#allocation3 + $0x8] sm:$0xff] 0
  %37 = vst [vmem:[#allocation4] sm:$0xff] 0.0
  %38 = vst [vmem:[#allocation4 + $0x8] sm:$0xff] 0.0
  %39 = vst [vmem:[#allocation5] sm:$0xff] 0.0
  %40 = vst [vmem:[#allocation5 + $0x8] sm:$0xff] 0.0
  %41 = vst [vmem:[#allocation6] sm:$0xff] 0.0
  %42 = vst [vmem:[#allocation6 + $0x8] sm:$0xff] 0.0
  %v43 = vld [vmem:[%s4] sm:$0xf]
  %v44 = vld [vmem:[%s6] sm:$0xf]
  %v45 = vld [vmem:[%s8] sm:$0x1]
  %v46 = vlaneseq
  %v47 = vand.u32 %v46, 127
  loop: start=0, step=1, limit=8
  $region38: #{character_language_model.1} parent=0 // loop_pre_header
    _
  $region39: #{character_language_model.1} parent=0 // loop_header
    %s49 = sphi 0, %s53
    %p50 = scmp.ge.s32.totalorder %s49, 8
  $region40: #{character_language_model.1} parent=0 // loop_header_branch
    %52 = sbr.rel (%p50) target = $region44
  $region41: #{character_language_model.1} parent=0 // loop_body
    %s54 = smul.u32 %s49, 16
    %s55 = scalar_lea.vmem %s0, %s54
    %v56 = vld [vmem:[%s55] sm:$0xff]
    %v57 = vld [vmem:[%s55 + $0x8] sm:$0xff]
    %58 = vset.pattern.permute.xlu0 0
    %59 = vperm.xlu0 %58, %v56
    %v60 = vpop.permute.xlu0 %59
    %61 = vset.pattern.permute.xlu0 0
    %62 = vperm.xlu0 %61, %v57
    %v63 = vpop.permute.xlu0 %62
    %vm64 = vcmp.eq.s32.totalorder %v60, %v47
    %vm65 = vcmp.eq.s32.totalorder %v63, %v47
    %v66 = vsel %vm64, 1.0, 0.0
    %v67 = vsel %vm65, 1.0, 0.0
    %v68 = vpack.c.bf16 %v67, %v66
    %v69 = vld [vmem:[%s1] sm:$0xff]
    %v70 = vld [vmem:[%s1 + $0x8] sm:$0xff]
    %v71 = vld [vmem:[%s1 + $0x10] sm:$0xff]
    %v72 = vld [vmem:[%s1 + $0x18] sm:$0xff]
    %v73 = vld [vmem:[%s1 + $0x20] sm:$0xff]
    %v74 = vld [vmem:[%s1 + $0x28] sm:$0xff]
    %v75 = vld [vmem:[%s1 + $0x30] sm:$0xff]
    %v76 = vld [vmem:[%s1 + $0x38] sm:$0xff]
    %v77 = vld [vmem:[%s1 + $0x40] sm:$0xff]
    %v78 = vld [vmem:[%s1 + $0x48] sm:$0xff]
    %v79 = vld [vmem:[%s1 + $0x50] sm:$0xff]
    %v80 = vld [vmem:[%s1 + $0x58] sm:$0xff]
    %v81 = vld [vmem:[%s1 + $0x60] sm:$0xff]
    %v82 = vld [vmem:[%s1 + $0x68] sm:$0xff]
    %v83 = vld [vmem:[%s1 + $0x70] sm:$0xff]
    %v84 = vld [vmem:[%s1 + $0x78] sm:$0xff]
    %v85 = vld [vmem:[%s1 + $0x80] sm:$0xff]
    %v86 = vld [vmem:[%s1 + $0x88] sm:$0xff]
    %v87 = vld [vmem:[%s1 + $0x90] sm:$0xff]
    %v88 = vld [vmem:[%s1 + $0x98] sm:$0xff]
    %v89 = vld [vmem:[%s1 + $0xa0] sm:$0xff]
    %v90 = vld [vmem:[%s1 + $0xa8] sm:$0xff]
    %v91 = vld [vmem:[%s1 + $0xb0] sm:$0xff]
    %v92 = vld [vmem:[%s1 + $0xb8] sm:$0xff]
    %v93 = vld [vmem:[%s1 + $0xc0] sm:$0xff]
    %v94 = vld [vmem:[%s1 + $0xc8] sm:$0xff]
    %v95 = vld [vmem:[%s1 + $0xd0] sm:$0xff]
    %v96 = vld [vmem:[%s1 + $0xd8] sm:$0xff]
    %v97 = vld [vmem:[%s1 + $0xe0] sm:$0xff]
    %v98 = vld [vmem:[%s1 + $0xe8] sm:$0xff]
    %v99 = vld [vmem:[%s1 + $0xf0] sm:$0xff]
    %v100 = vld [vmem:[%s1 + $0xf8] sm:$0xff]
    %v101 = vld [vmem:[#allocation2] sm:$0xff]
    %v102 = vld [vmem:[%s2] sm:$0xff]
    %v103 = vld [vmem:[%s2 + $0x8] sm:$0xff]
    %v104 = vld [vmem:[%s2 + $0x10] sm:$0xff]
    %v105 = vld [vmem:[%s2 + $0x18] sm:$0xff]
    %v106 = vld [vmem:[%s2 + $0x20] sm:$0xff]
    %v107 = vld [vmem:[%s2 + $0x28] sm:$0xff]
    %v108 = vld [vmem:[%s2 + $0x30] sm:$0xff]
    %v109 = vld [vmem:[%s2 + $0x38] sm:$0xff]
    %v110 = vld [vmem:[%s2 + $0x40] sm:$0xff]
    %v111 = vld [vmem:[%s2 + $0x48] sm:$0xff]
    %v112 = vld [vmem:[%s2 + $0x50] sm:$0xff]
    %v113 = vld [vmem:[%s2 + $0x58] sm:$0xff]
    %v114 = vld [vmem:[%s2 + $0x60] sm:$0xff]
    %v115 = vld [vmem:[%s2 + $0x68] sm:$0xff]
    %v116 = vld [vmem:[%s2 + $0x70] sm:$0xff]
    %v117 = vld [vmem:[%s2 + $0x78] sm:$0xff]
    %v118 = vld [vmem:[%s2 + $0x80] sm:$0xff]
    %v119 = vld [vmem:[%s2 + $0x88] sm:$0xff]
    %v120 = vld [vmem:[%s2 + $0x90] sm:$0xff]
    %v121 = vld [vmem:[%s2 + $0x98] sm:$0xff]
    %v122 = vld [vmem:[%s2 + $0xa0] sm:$0xff]
    %v123 = vld [vmem:[%s2 + $0xa8] sm:$0xff]
    %v124 = vld [vmem:[%s2 + $0xb0] sm:$0xff]
    %v125 = vld [vmem:[%s2 + $0xb8] sm:$0xff]
    %v126 = vld [vmem:[%s2 + $0xc0] sm:$0xff]
    %v127 = vld [vmem:[%s2 + $0xc8] sm:$0xff]
    %v128 = vld [vmem:[%s2 + $0xd0] sm:$0xff]
    %v129 = vld [vmem:[%s2 + $0xd8] sm:$0xff]
    %v130 = vld [vmem:[%s2 + $0xe0] sm:$0xff]
    %v131 = vld [vmem:[%s2 + $0xe8] sm:$0xff]
    %v132 = vld [vmem:[%s2 + $0xf0] sm:$0xff]
    %v133 = vld [vmem:[%s2 + $0xf8] sm:$0xff]
    %v166 = vunpack.c.l.b16 %v102
    %v167 = vunpack.c.h.b16 %v102
    %v168 = vunpack.c.l.b16 %v103
    %v169 = vunpack.c.h.b16 %v103
    %v170 = vunpack.c.l.b16 %v104
    %v171 = vunpack.c.h.b16 %v104
    %v172 = vunpack.c.l.b16 %v105
    %v173 = vunpack.c.h.b16 %v105
    %v174 = vunpack.c.l.b16 %v106
    %v175 = vunpack.c.h.b16 %v106
    %v176 = vunpack.c.l.b16 %v107
    %v177 = vunpack.c.h.b16 %v107
    %v178 = vunpack.c.l.b16 %v108
    %v179 = vunpack.c.h.b16 %v108
    %v180 = vunpack.c.l.b16 %v109
    %v181 = vunpack.c.h.b16 %v109
    %v182 = vunpack.c.l.b16 %v110
    %v183 = vunpack.c.h.b16 %v110
    %v184 = vunpack.c.l.b16 %v111
    %v185 = vunpack.c.h.b16 %v111
    %v186 = vunpack.c.l.b16 %v112
    %v187 = vunpack.c.h.b16 %v112
    %v188 = vunpack.c.l.b16 %v113
    %v189 = vunpack.c.h.b16 %v113
    %v190 = vunpack.c.l.b16 %v114
    %v191 = vunpack.c.h.b16 %v114
    %v192 = vunpack.c.l.b16 %v115
    %v193 = vunpack.c.h.b16 %v115
    %v194 = vunpack.c.l.b16 %v116
    %v195 = vunpack.c.h.b16 %v116
    %v196 = vunpack.c.l.b16 %v117
    %v197 = vunpack.c.h.b16 %v117
    %v198 = vunpack.c.l.b16 %v118
    %v199 = vunpack.c.h.b16 %v118
    %v200 = vunpack.c.l.b16 %v119
    %v201 = vunpack.c.h.b16 %v119
    %v202 = vunpack.c.l.b16 %v120
    %v203 = vunpack.c.h.b16 %v120
    %v204 = vunpack.c.l.b16 %v121
    %v205 = vunpack.c.h.b16 %v121
    %v206 = vunpack.c.l.b16 %v122
    %v207 = vunpack.c.h.b16 %v122
    %v208 = vunpack.c.l.b16 %v123
    %v209 = vunpack.c.h.b16 %v123
    %v210 = vunpack.c.l.b16 %v124
    %v211 = vunpack.c.h.b16 %v124
    %v212 = vunpack.c.l.b16 %v125
    %v213 = vunpack.c.h.b16 %v125
    %v214 = vunpack.c.l.b16 %v126
    %v215 = vunpack.c.h.b16 %v126
    %v216 = vunpack.c.l.b16 %v127
    %v217 = vunpack.c.h.b16 %v127
    %v218 = vunpack.c.l.b16 %v128
    %v219 = vunpack.c.h.b16 %v128
    %v220 = vunpack.c.l.b16 %v129
    %v221 = vunpack.c.h.b16 %v129
    %v222 = vunpack.c.l.b16 %v130
    %v223 = vunpack.c.h.b16 %v130
    %v224 = vunpack.c.l.b16 %v131
    %v225 = vunpack.c.h.b16 %v131
    %v226 = vunpack.c.l.b16 %v132
    %v227 = vunpack.c.h.b16 %v132
    %v228 = vunpack.c.l.b16 %v133
    %v229 = vunpack.c.h.b16 %v133
    %v230 = vpack.c.b16 %v170, %v166
    %v231 = vpack.c.b16 %v171, %v167
    %v232 = vpack.c.b16 %v172, %v168
    %v233 = vpack.c.b16 %v173, %v169
    %v234 = vpack.c.b16 %v178, %v174
    %v235 = vpack.c.b16 %v179, %v175
    %v236 = vpack.c.b16 %v180, %v176
    %v237 = vpack.c.b16 %v181, %v177
    %v238 = vpack.c.b16 %v186, %v182
    %v239 = vpack.c.b16 %v187, %v183
    %v240 = vpack.c.b16 %v188, %v184
    %v241 = vpack.c.b16 %v189, %v185
    %v242 = vpack.c.b16 %v194, %v190
    %v243 = vpack.c.b16 %v195, %v191
    %v244 = vpack.c.b16 %v196, %v192
    %v245 = vpack.c.b16 %v197, %v193
    %v246 = vpack.c.b16 %v202, %v198
    %v247 = vpack.c.b16 %v203, %v199
    %v248 = vpack.c.b16 %v204, %v200
    %v249 = vpack.c.b16 %v205, %v201
    %v250 = vpack.c.b16 %v210, %v206
    %v251 = vpack.c.b16 %v211, %v207
    %v252 = vpack.c.b16 %v212, %v208
    %v253 = vpack.c.b16 %v213, %v209
    %v254 = vpack.c.b16 %v218, %v214
    %v255 = vpack.c.b16 %v219, %v215
    %v256 = vpack.c.b16 %v220, %v216
    %v257 = vpack.c.b16 %v221, %v217
    %v258 = vpack.c.b16 %v226, %v222
    %v259 = vpack.c.b16 %v227, %v223
    %v260 = vpack.c.b16 %v228, %v224
    %v261 = vpack.c.b16 %v229, %v225
    %294 = vmatprep.subr.bf16.mxu0 %v231
    %295 = vmatpush1.bf16.msra.mxu0 %v230
    %296 = vmatprep.subr.bf16.mxu0 %v235
    %297 = vmatpush1.bf16.msra.mxu0 %v234
    %298 = vmatprep.subr.bf16.mxu0 %v239
    %299 = vmatpush1.bf16.msra.mxu0 %v238
    %300 = vmatprep.subr.bf16.mxu0 %v243
    %301 = vmatpush1.bf16.msra.mxu0 %v242
    %302 = vmatprep.subr.bf16.mxu0 %v247
    %303 = vmatpush1.bf16.msra.mxu0 %v246
    %304 = vmatprep.subr.bf16.mxu0 %v251
    %305 = vmatpush1.bf16.msra.mxu0 %v250
    %306 = vmatprep.subr.bf16.mxu0 %v255
    %307 = vmatpush1.bf16.msra.mxu0 %v254
    %308 = vmatprep.subr.bf16.mxu0 %v259
    %309 = vmatpush1.bf16.msra.mxu0 %v258
    %310 = vmatprep.subr.bf16.mxu0 0
    %311 = vmatpush1.bf16.msra.mxu0 0
    %312 = vmatprep.subr.bf16.mxu0 0
    %313 = vmatpush1.bf16.msra.mxu0 0
    %314 = vmatprep.subr.bf16.mxu0 0
    %315 = vmatpush1.bf16.msra.mxu0 0
    %316 = vmatprep.subr.bf16.mxu0 0
    %317 = vmatpush1.bf16.msra.mxu0 0
    %318 = vmatprep.subr.bf16.mxu0 0
    %319 = vmatpush1.bf16.msra.mxu0 0
    %320 = vmatprep.subr.bf16.mxu0 0
    %321 = vmatpush1.bf16.msra.mxu0 0
    %322 = vmatprep.subr.bf16.mxu0 0
    %323 = vmatpush1.bf16.msra.mxu0 0
    %324 = vmatprep.subr.bf16.mxu0 0
    %325 = vmatpush1.bf16.msra.mxu0 0
    %326 = vmatprep.mubr.bf16.mxu0 0
    %327 = vmatmul.mubr.bf16.gmra.mrb[0].mxu0 %v101
    %v328 = vpop.f32.mrb[0].mxu0
    %v329 = vadd.f32 0.0, %v328
    %v330 = vpop.f32.mrb[0].mxu0
    %v331 = vadd.f32 0.0, %v330
    %v332 = vpop.f32.mrb[0].mxu0
    %v333 = vadd.f32 0.0, %v332
    %v334 = vpop.f32.mrb[0].mxu0
    %v335 = vadd.f32 0.0, %v334
    %336 = vdwg.mxu0
    %337 = vmatprep.subr.bf16.mxu0 %v233
    %338 = vmatpush1.bf16.msra.mxu0 %v232
    %339 = vmatprep.subr.bf16.mxu0 %v237
    %340 = vmatpush1.bf16.msra.mxu0 %v236
    %341 = vmatprep.subr.bf16.mxu0 %v241
    %342 = vmatpush1.bf16.msra.mxu0 %v240
    %343 = vmatprep.subr.bf16.mxu0 %v245
    %344 = vmatpush1.bf16.msra.mxu0 %v244
    %345 = vmatprep.subr.bf16.mxu0 %v249
    %346 = vmatpush1.bf16.msra.mxu0 %v248
    %347 = vmatprep.subr.bf16.mxu0 %v253
    %348 = vmatpush1.bf16.msra.mxu0 %v252
    %349 = vmatprep.subr.bf16.mxu0 %v257
    %350 = vmatpush1.bf16.msra.mxu0 %v256
    %351 = vmatprep.subr.bf16.mxu0 %v261
    %352 = vmatpush1.bf16.msra.mxu0 %v260
    %353 = vmatprep.subr.bf16.mxu0 0
    %354 = vmatpush1.bf16.msra.mxu0 0
    %355 = vmatprep.subr.bf16.mxu0 0
    %356 = vmatpush1.bf16.msra.mxu0 0
    %357 = vmatprep.subr.bf16.mxu0 0
    %358 = vmatpush1.bf16.msra.mxu0 0
    %359 = vmatprep.subr.bf16.mxu0 0
    %360 = vmatpush1.bf16.msra.mxu0 0
    %361 = vmatprep.subr.bf16.mxu0 0
    %362 = vmatpush1.bf16.msra.mxu0 0
    %363 = vmatprep.subr.bf16.mxu0 0
    %364 = vmatpush1.bf16.msra.mxu0 0
    %365 = vmatprep.subr.bf16.mxu0 0
    %366 = vmatpush1.bf16.msra.mxu0 0
    %367 = vmatprep.subr.bf16.mxu0 0
    %368 = vmatpush1.bf16.msra.mxu0 0
    %369 = vmatprep.mubr.bf16.mxu0 0
    %370 = vmatmul.mubr.bf16.gmra.mrb[0].mxu0 %v101
    %v371 = vpop.f32.mrb[0].mxu0
    %v372 = vadd.f32 0.0, %v371
    %v373 = vpop.f32.mrb[0].mxu0
    %v374 = vadd.f32 0.0, %v373
    %v375 = vpop.f32.mrb[0].mxu0
    %v376 = vadd.f32 0.0, %v375
    %v377 = vpop.f32.mrb[0].mxu0
    %v378 = vadd.f32 0.0, %v377
    %379 = vdwg.mxu0
    %v412 = vunpack.c.l.b16 %v69
    %v413 = vunpack.c.h.b16 %v69
    %v414 = vunpack.c.l.b16 %v70
    %v415 = vunpack.c.h.b16 %v70
    %v416 = vunpack.c.l.b16 %v71
    %v417 = vunpack.c.h.b16 %v71
    %v418 = vunpack.c.l.b16 %v72
    %v419 = vunpack.c.h.b16 %v72
    %v420 = vunpack.c.l.b16 %v73
    %v421 = vunpack.c.h.b16 %v73
    %v422 = vunpack.c.l.b16 %v74
    %v423 = vunpack.c.h.b16 %v74
    %v424 = vunpack.c.l.b16 %v75
    %v425 = vunpack.c.h.b16 %v75
    %v426 = vunpack.c.l.b16 %v76
    %v427 = vunpack.c.h.b16 %v76
    %v428 = vunpack.c.l.b16 %v77
    %v429 = vunpack.c.h.b16 %v77
    %v430 = vunpack.c.l.b16 %v78
    %v431 = vunpack.c.h.b16 %v78
    %v432 = vunpack.c.l.b16 %v79
    %v433 = vunpack.c.h.b16 %v79
    %v434 = vunpack.c.l.b16 %v80
    %v435 = vunpack.c.h.b16 %v80
    %v436 = vunpack.c.l.b16 %v81
    %v437 = vunpack.c.h.b16 %v81
    %v438 = vunpack.c.l.b16 %v82
    %v439 = vunpack.c.h.b16 %v82
    %v440 = vunpack.c.l.b16 %v83
    %v441 = vunpack.c.h.b16 %v83
    %v442 = vunpack.c.l.b16 %v84
    %v443 = vunpack.c.h.b16 %v84
    %v444 = vunpack.c.l.b16 %v85
    %v445 = vunpack.c.h.b16 %v85
    %v446 = vunpack.c.l.b16 %v86
    %v447 = vunpack.c.h.b16 %v86
    %v448 = vunpack.c.l.b16 %v87
    %v449 = vunpack.c.h.b16 %v87
    %v450 = vunpack.c.l.b16 %v88
    %v451 = vunpack.c.h.b16 %v88
    %v452 = vunpack.c.l.b16 %v89
    %v453 = vunpack.c.h.b16 %v89
    %v454 = vunpack.c.l.b16 %v90
    %v455 = vunpack.c.h.b16 %v90
    %v456 = vunpack.c.l.b16 %v91
    %v457 = vunpack.c.h.b16 %v91
    %v458 = vunpack.c.l.b16 %v92
    %v459 = vunpack.c.h.b16 %v92
    %v460 = vunpack.c.l.b16 %v93
    %v461 = vunpack.c.h.b16 %v93
    %v462 = vunpack.c.l.b16 %v94
    %v463 = vunpack.c.h.b16 %v94
    %v464 = vunpack.c.l.b16 %v95
    %v465 = vunpack.c.h.b16 %v95
    %v466 = vunpack.c.l.b16 %v96
    %v467 = vunpack.c.h.b16 %v96
    %v468 = vunpack.c.l.b16 %v97
    %v469 = vunpack.c.h.b16 %v97
    %v470 = vunpack.c.l.b16 %v98
    %v471 = vunpack.c.h.b16 %v98
    %v472 = vunpack.c.l.b16 %v99
    %v473 = vunpack.c.h.b16 %v99
    %v474 = vunpack.c.l.b16 %v100
    %v475 = vunpack.c.h.b16 %v100
    %v476 = vpack.c.b16 %v416, %v412
    %v477 = vpack.c.b16 %v417, %v413
    %v478 = vpack.c.b16 %v418, %v414
    %v479 = vpack.c.b16 %v419, %v415
    %v480 = vpack.c.b16 %v424, %v420
    %v481 = vpack.c.b16 %v425, %v421
    %v482 = vpack.c.b16 %v426, %v422
    %v483 = vpack.c.b16 %v427, %v423
    %v484 = vpack.c.b16 %v432, %v428
    %v485 = vpack.c.b16 %v433, %v429
    %v486 = vpack.c.b16 %v434, %v430
    %v487 = vpack.c.b16 %v435, %v431
    %v488 = vpack.c.b16 %v440, %v436
    %v489 = vpack.c.b16 %v441, %v437
    %v490 = vpack.c.b16 %v442, %v438
    %v491 = vpack.c.b16 %v443, %v439
    %v492 = vpack.c.b16 %v448, %v444
    %v493 = vpack.c.b16 %v449, %v445
    %v494 = vpack.c.b16 %v450, %v446
    %v495 = vpack.c.b16 %v451, %v447
    %v496 = vpack.c.b16 %v456, %v452
    %v497 = vpack.c.b16 %v457, %v453
    %v498 = vpack.c.b16 %v458, %v454
    %v499 = vpack.c.b16 %v459, %v455
    %v500 = vpack.c.b16 %v464, %v460
    %v501 = vpack.c.b16 %v465, %v461
    %v502 = vpack.c.b16 %v466, %v462
    %v503 = vpack.c.b16 %v467, %v463
    %v504 = vpack.c.b16 %v472, %v468
    %v505 = vpack.c.b16 %v473, %v469
    %v506 = vpack.c.b16 %v474, %v470
    %v507 = vpack.c.b16 %v475, %v471
    %540 = vmatprep.subr.bf16.mxu0 %v477
    %541 = vmatpush1.bf16.msra.mxu0 %v476
    %542 = vmatprep.subr.bf16.mxu0 %v481
    %543 = vmatpush1.bf16.msra.mxu0 %v480
    %544 = vmatprep.subr.bf16.mxu0 %v485
    %545 = vmatpush1.bf16.msra.mxu0 %v484
    %546 = vmatprep.subr.bf16.mxu0 %v489
    %547 = vmatpush1.bf16.msra.mxu0 %v488
    %548 = vmatprep.subr.bf16.mxu0 %v493
    %549 = vmatpush1.bf16.msra.mxu0 %v492
    %550 = vmatprep.subr.bf16.mxu0 %v497
    %551 = vmatpush1.bf16.msra.mxu0 %v496
    %552 = vmatprep.subr.bf16.mxu0 %v501
    %553 = vmatpush1.bf16.msra.mxu0 %v500
    %554 = vmatprep.subr.bf16.mxu0 %v505
    %555 = vmatpush1.bf16.msra.mxu0 %v504
    %556 = vmatprep.subr.bf16.mxu0 0
    %557 = vmatpush1.bf16.msra.mxu0 0
    %558 = vmatprep.subr.bf16.mxu0 0
    %559 = vmatpush1.bf16.msra.mxu0 0
    %560 = vmatprep.subr.bf16.mxu0 0
    %561 = vmatpush1.bf16.msra.mxu0 0
    %562 = vmatprep.subr.bf16.mxu0 0
    %563 = vmatpush1.bf16.msra.mxu0 0
    %564 = vmatprep.subr.bf16.mxu0 0
    %565 = vmatpush1.bf16.msra.mxu0 0
    %566 = vmatprep.subr.bf16.mxu0 0
    %567 = vmatpush1.bf16.msra.mxu0 0
    %568 = vmatprep.subr.bf16.mxu0 0
    %569 = vmatpush1.bf16.msra.mxu0 0
    %570 = vmatprep.subr.bf16.mxu0 0
    %571 = vmatpush1.bf16.msra.mxu0 0
    %572 = vmatprep.mubr.bf16.mxu0 0
    %573 = vmatmul.mubr.bf16.gmra.mrb[0].mxu0 %v68
    %v574 = vpop.f32.mrb[0].mxu0
    %v575 = vadd.f32 %v329, %v574
    %v576 = vpop.f32.mrb[0].mxu0
    %v577 = vadd.f32 %v331, %v576
    %v578 = vpop.f32.mrb[0].mxu0
    %v579 = vadd.f32 %v333, %v578
    %v580 = vpop.f32.mrb[0].mxu0
    %v581 = vadd.f32 %v335, %v580
    %582 = vdwg.mxu0
    %583 = vmatprep.subr.bf16.mxu0 %v479
    %584 = vmatpush1.bf16.msra.mxu0 %v478
    %585 = vmatprep.subr.bf16.mxu0 %v483
    %586 = vmatpush1.bf16.msra.mxu0 %v482
    %587 = vmatprep.subr.bf16.mxu0 %v487
    %588 = vmatpush1.bf16.msra.mxu0 %v486
    %589 = vmatprep.subr.bf16.mxu0 %v491
    %590 = vmatpush1.bf16.msra.mxu0 %v490
    %591 = vmatprep.subr.bf16.mxu0 %v495
    %592 = vmatpush1.bf16.msra.mxu0 %v494
    %593 = vmatprep.subr.bf16.mxu0 %v499
    %594 = vmatpush1.bf16.msra.mxu0 %v498
    %595 = vmatprep.subr.bf16.mxu0 %v503
    %596 = vmatpush1.bf16.msra.mxu0 %v502
    %597 = vmatprep.subr.bf16.mxu0 %v507
    %598 = vmatpush1.bf16.msra.mxu0 %v506
    %599 = vmatprep.subr.bf16.mxu0 0
    %600 = vmatpush1.bf16.msra.mxu0 0
    %601 = vmatprep.subr.bf16.mxu0 0
    %602 = vmatpush1.bf16.msra.mxu0 0
    %603 = vmatprep.subr.bf16.mxu0 0
    %604 = vmatpush1.bf16.msra.mxu0 0
    %605 = vmatprep.subr.bf16.mxu0 0
    %606 = vmatpush1.bf16.msra.mxu0 0
    %607 = vmatprep.subr.bf16.mxu0 0
    %608 = vmatpush1.bf16.msra.mxu0 0
    %609 = vmatprep.subr.bf16.mxu0 0
    %610 = vmatpush1.bf16.msra.mxu0 0
    %611 = vmatprep.subr.bf16.mxu0 0
    %612 = vmatpush1.bf16.msra.mxu0 0
    %613 = vmatprep.subr.bf16.mxu0 0
    %614 = vmatpush1.bf16.msra.mxu0 0
    %615 = vmatprep.mubr.bf16.mxu0 0
    %616 = vmatmul.mubr.bf16.gmra.mrb[0].mxu0 %v68
    %v617 = vpop.f32.mrb[0].mxu0
    %v618 = vadd.f32 %v372, %v617
    %v619 = vpop.f32.mrb[0].mxu0
    %v620 = vadd.f32 %v374, %v619
    %v621 = vpop.f32.mrb[0].mxu0
    %v622 = vadd.f32 %v376, %v621
    %v623 = vpop.f32.mrb[0].mxu0
    %v624 = vadd.f32 %v378, %v623
    %625 = vdwg.mxu0
    %v626 = vld [vmem:[#allocation4] sm:$0xff]
    %v627 = vld [vmem:[#allocation4 + $0x8] sm:$0xff]
    %v628 = vxor.u32 %v575, 2147483648
    %v629 = vxor.u32 %v579, 2147483648
    %v630 = vmul.f32 %v628, 1.442695
    %v631 = vpow.pop %v630
    %v632 = vmul.f32 %v629, 1.442695
    %v633 = vpow.pop %v632
    %v634 = vadd.f32 %v631, 1.0
    %v635 = vadd.f32 %v633, 1.0
    %v636 = vrcp.pop %v634
    %v637 = vmul.f32 1.0, %v636
    %v638 = vrcp.pop %v635
    %v639 = vmul.f32 1.0, %v638
    %v640 = vxor.u32 %v577, 2147483648
    %v641 = vxor.u32 %v581, 2147483648
    %v642 = vmul.f32 %v640, 1.442695
    %v643 = vpow.pop %v642
    %v644 = vmul.f32 %v641, 1.442695
    %v645 = vpow.pop %v644
    %v646 = vadd.f32 %v643, 1.0
    %v647 = vadd.f32 %v645, 1.0
    %v648 = vrcp.pop %v646
    %v649 = vmul.f32 1.0, %v648
    %v650 = vrcp.pop %v647
    %v651 = vmul.f32 1.0, %v650
    %v652 = vtanh.pop %v618
    %v653 = vtanh.pop %v622
    %v654 = vxor.u32 %v620, 2147483648
    %v655 = vxor.u32 %v624, 2147483648
    %v656 = vmul.f32 %v654, 1.442695
    %v657 = vpow.pop %v656
    %v658 = vmul.f32 %v655, 1.442695
    %v659 = vpow.pop %v658
    %v660 = vadd.f32 %v657, 1.0
    %v661 = vadd.f32 %v659, 1.0
    %v662 = vrcp.pop %v660
    %v663 = vmul.f32 1.0, %v662
    %v664 = vrcp.pop %v661
    %v665 = vmul.f32 1.0, %v664
    %v666 = vmul.f32 %v649, %v626
    %v667 = vmul.f32 %v651, %v627
    %v668 = vmul.f32 %v637, %v652
    %v669 = vmul.f32 %v639, %v653
    %v670 = vadd.f32 %v666, %v668
    %v671 = vadd.f32 %v667, %v669
    %v672 = vtanh.pop %v670
    %v673 = vtanh.pop %v671
    %v674 = vmul.f32 %v663, %v672
    %v675 = vmul.f32 %v665, %v673
    %676 = vst [vmem:[#allocation4] sm:$0xff] %v670
    %677 = vst [vmem:[#allocation4 + $0x8] sm:$0xff] %v671
    %v678 = vpack.c.bf16 %v675, %v674
    %679 = vst [vmem:[#allocation2] sm:$0xff] %v678
    %v680 = vld [vmem:[#allocation2] sm:$0xff]
    %v681 = vld [vmem:[#allocation2 + $0x8] sm:$0xff]
    %v682 = vld [vmem:[%s3] sm:$0xff]
    %v683 = vld [vmem:[%s3 + $0x8] sm:$0xff]
    %v684 = vld [vmem:[%s3 + $0x10] sm:$0xff]
    %v685 = vld [vmem:[%s3 + $0x18] sm:$0xff]
    %v686 = vld [vmem:[%s3 + $0x20] sm:$0xff]
    %v687 = vld [vmem:[%s3 + $0x28] sm:$0xff]
    %v688 = vld [vmem:[%s3 + $0x30] sm:$0xff]
    %v689 = vld [vmem:[%s3 + $0x38] sm:$0xff]
    %v690 = vld [vmem:[%s3 + $0x40] sm:$0xff]
    %v691 = vld [vmem:[%s3 + $0x48] sm:$0xff]
    %v692 = vld [vmem:[%s3 + $0x50] sm:$0xff]
    %v693 = vld [vmem:[%s3 + $0x58] sm:$0xff]
    %v694 = vld [vmem:[%s3 + $0x60] sm:$0xff]
    %v695 = vld [vmem:[%s3 + $0x68] sm:$0xff]
    %v696 = vld [vmem:[%s3 + $0x70] sm:$0xff]
    %v697 = vld [vmem:[%s3 + $0x78] sm:$0xff]
    %v698 = vld [vmem:[%s3 + $0x80] sm:$0xff]
    %v699 = vld [vmem:[%s3 + $0x88] sm:$0xff]
    %v700 = vld [vmem:[%s3 + $0x90] sm:$0xff]
    %v701 = vld [vmem:[%s3 + $0x98] sm:$0xff]
    %v702 = vld [vmem:[%s3 + $0xa0] sm:$0xff]
    %v703 = vld [vmem:[%s3 + $0xa8] sm:$0xff]
    %v704 = vld [vmem:[%s3 + $0xb0] sm:$0xff]
    %v705 = vld [vmem:[%s3 + $0xb8] sm:$0xff]
    %v706 = vld [vmem:[%s3 + $0xc0] sm:$0xff]
    %v707 = vld [vmem:[%s3 + $0xc8] sm:$0xff]
    %v708 = vld [vmem:[%s3 + $0xd0] sm:$0xff]
    %v709 = vld [vmem:[%s3 + $0xd8] sm:$0xff]
    %v710 = vld [vmem:[%s3 + $0xe0] sm:$0xff]
    %v711 = vld [vmem:[%s3 + $0xe8] sm:$0xff]
    %v712 = vld [vmem:[%s3 + $0xf0] sm:$0xff]
    %v713 = vld [vmem:[%s3 + $0xf8] sm:$0xff]
    %v714 = vld [vmem:[%s3 + $0x100] sm:$0xff]
    %v715 = vld [vmem:[%s3 + $0x108] sm:$0xff]
    %v716 = vld [vmem:[%s3 + $0x110] sm:$0xff]
    %v717 = vld [vmem:[%s3 + $0x118] sm:$0xff]
    %v718 = vld [vmem:[%s3 + $0x120] sm:$0xff]
    %v719 = vld [vmem:[%s3 + $0x128] sm:$0xff]
    %v720 = vld [vmem:[%s3 + $0x130] sm:$0xff]
    %v721 = vld [vmem:[%s3 + $0x138] sm:$0xff]
    %v722 = vld [vmem:[%s3 + $0x140] sm:$0xff]
    %v723 = vld [vmem:[%s3 + $0x148] sm:$0xff]
    %v724 = vld [vmem:[%s3 + $0x150] sm:$0xff]
    %v725 = vld [vmem:[%s3 + $0x158] sm:$0xff]
    %v726 = vld [vmem:[%s3 + $0x160] sm:$0xff]
    %v727 = vld [vmem:[%s3 + $0x168] sm:$0xff]
    %v728 = vld [vmem:[%s3 + $0x170] sm:$0xff]
    %v729 = vld [vmem:[%s3 + $0x178] sm:$0xff]
    %v730 = vld [vmem:[%s3 + $0x180] sm:$0xff]
    %v731 = vld [vmem:[%s3 + $0x188] sm:$0xff]
    %v732 = vld [vmem:[%s3 + $0x190] sm:$0xff]
    %v733 = vld [vmem:[%s3 + $0x198] sm:$0xff]
    %v734 = vld [vmem:[%s3 + $0x1a0] sm:$0xff]
    %v735 = vld [vmem:[%s3 + $0x1a8] sm:$0xff]
    %v736 = vld [vmem:[%s3 + $0x1b0] sm:$0xff]
    %v737 = vld [vmem:[%s3 + $0x1b8] sm:$0xff]
    %v738 = vld [vmem:[%s3 + $0x1c0] sm:$0xff]
    %v739 = vld [vmem:[%s3 + $0x1c8] sm:$0xff]
    %v740 = vld [vmem:[%s3 + $0x1d0] sm:$0xff]
    %v741 = vld [vmem:[%s3 + $0x1d8] sm:$0xff]
    %v742 = vld [vmem:[%s3 + $0x1e0] sm:$0xff]
    %v743 = vld [vmem:[%s3 + $0x1e8] sm:$0xff]
    %v744 = vld [vmem:[%s3 + $0x1f0] sm:$0xff]
    %v745 = vld [vmem:[%s3 + $0x1f8] sm:$0xff]
    %v747 = vlaneseq
    %v748 = vshrl.u32 %v747, 7
    %v749 = vsub.s32 0, %v748
    %v750 = vrot.slane %v43, %v749
    %v751 = vlaneseq
    %v752 = vshrl.u32 %v751, 7
    %v753 = vsub.s32 1, %v752
    %v754 = vrot.slane %v43, %v753
    %v755 = vlaneseq
    %v756 = vshrl.u32 %v755, 7
    %v757 = vsub.s32 2, %v756
    %v758 = vrot.slane %v43, %v757
    %v759 = vlaneseq
    %v760 = vshrl.u32 %v759, 7
    %v761 = vsub.s32 3, %v760
    %v762 = vrot.slane %v43, %v761
    %v831 = vunpack.c.l.b16 %v682
    %v832 = vunpack.c.h.b16 %v682
    %v833 = vunpack.c.l.b16 %v683
    %v834 = vunpack.c.h.b16 %v683
    %v835 = vunpack.c.l.b16 %v684
    %v836 = vunpack.c.h.b16 %v684
    %v837 = vunpack.c.l.b16 %v685
    %v838 = vunpack.c.h.b16 %v685
    %v839 = vunpack.c.l.b16 %v686
    %v840 = vunpack.c.h.b16 %v686
    %v841 = vunpack.c.l.b16 %v687
    %v842 = vunpack.c.h.b16 %v687
    %v843 = vunpack.c.l.b16 %v688
    %v844 = vunpack.c.h.b16 %v688
    %v845 = vunpack.c.l.b16 %v689
    %v846 = vunpack.c.h.b16 %v689
    %v847 = vunpack.c.l.b16 %v690
    %v848 = vunpack.c.h.b16 %v690
    %v849 = vunpack.c.l.b16 %v691
    %v850 = vunpack.c.h.b16 %v691
    %v851 = vunpack.c.l.b16 %v692
    %v852 = vunpack.c.h.b16 %v692
    %v853 = vunpack.c.l.b16 %v693
    %v854 = vunpack.c.h.b16 %v693
    %v855 = vunpack.c.l.b16 %v694
    %v856 = vunpack.c.h.b16 %v694
    %v857 = vunpack.c.l.b16 %v695
    %v858 = vunpack.c.h.b16 %v695
    %v859 = vunpack.c.l.b16 %v696
    %v860 = vunpack.c.h.b16 %v696
    %v861 = vunpack.c.l.b16 %v697
    %v862 = vunpack.c.h.b16 %v697
    %v863 = vunpack.c.l.b16 %v698
    %v864 = vunpack.c.h.b16 %v698
    %v865 = vunpack.c.l.b16 %v699
    %v866 = vunpack.c.h.b16 %v699
    %v867 = vunpack.c.l.b16 %v700
    %v868 = vunpack.c.h.b16 %v700
    %v869 = vunpack.c.l.b16 %v701
    %v870 = vunpack.c.h.b16 %v701
    %v871 = vunpack.c.l.b16 %v702
    %v872 = vunpack.c.h.b16 %v702
    %v873 = vunpack.c.l.b16 %v703
    %v874 = vunpack.c.h.b16 %v703
    %v875 = vunpack.c.l.b16 %v704
    %v876 = vunpack.c.h.b16 %v704
    %v877 = vunpack.c.l.b16 %v705
    %v878 = vunpack.c.h.b16 %v705
    %v879 = vunpack.c.l.b16 %v706
    %v880 = vunpack.c.h.b16 %v706
    %v881 = vunpack.c.l.b16 %v707
    %v882 = vunpack.c.h.b16 %v707
    %v883 = vunpack.c.l.b16 %v708
    %v884 = vunpack.c.h.b16 %v708
    %v885 = vunpack.c.l.b16 %v709
    %v886 = vunpack.c.h.b16 %v709
    %v887 = vunpack.c.l.b16 %v710
    %v888 = vunpack.c.h.b16 %v710
    %v889 = vunpack.c.l.b16 %v711
    %v890 = vunpack.c.h.b16 %v711
    %v891 = vunpack.c.l.b16 %v712
    %v892 = vunpack.c.h.b16 %v712
    %v893 = vunpack.c.l.b16 %v713
    %v894 = vunpack.c.h.b16 %v713
    %v895 = vunpack.c.l.b16 %v714
    %v896 = vunpack.c.h.b16 %v714
    %v897 = vunpack.c.l.b16 %v715
    %v898 = vunpack.c.h.b16 %v715
    %v899 = vunpack.c.l.b16 %v716
    %v900 = vunpack.c.h.b16 %v716
    %v901 = vunpack.c.l.b16 %v717
    %v902 = vunpack.c.h.b16 %v717
    %v903 = vunpack.c.l.b16 %v718
    %v904 = vunpack.c.h.b16 %v718
    %v905 = vunpack.c.l.b16 %v719
    %v906 = vunpack.c.h.b16 %v719
    %v907 = vunpack.c.l.b16 %v720
    %v908 = vunpack.c.h.b16 %v720
    %v909 = vunpack.c.l.b16 %v721
    %v910 = vunpack.c.h.b16 %v721
    %v911 = vunpack.c.l.b16 %v722
    %v912 = vunpack.c.h.b16 %v722
    %v913 = vunpack.c.l.b16 %v723
    %v914 = vunpack.c.h.b16 %v723
    %v915 = vunpack.c.l.b16 %v724
    %v916 = vunpack.c.h.b16 %v724
    %v917 = vunpack.c.l.b16 %v725
    %v918 = vunpack.c.h.b16 %v725
    %v919 = vunpack.c.l.b16 %v726
    %v920 = vunpack.c.h.b16 %v726
    %v921 = vunpack.c.l.b16 %v727
    %v922 = vunpack.c.h.b16 %v727
    %v923 = vunpack.c.l.b16 %v728
    %v924 = vunpack.c.h.b16 %v728
    %v925 = vunpack.c.l.b16 %v729
    %v926 = vunpack.c.h.b16 %v729
    %v927 = vunpack.c.l.b16 %v730
    %v928 = vunpack.c.h.b16 %v730
    %v929 = vunpack.c.l.b16 %v731
    %v930 = vunpack.c.h.b16 %v731
    %v931 = vunpack.c.l.b16 %v732
    %v932 = vunpack.c.h.b16 %v732
    %v933 = vunpack.c.l.b16 %v733
    %v934 = vunpack.c.h.b16 %v733
    %v935 = vunpack.c.l.b16 %v734
    %v936 = vunpack.c.h.b16 %v734
    %v937 = vunpack.c.l.b16 %v735
    %v938 = vunpack.c.h.b16 %v735
    %v939 = vunpack.c.l.b16 %v736
    %v940 = vunpack.c.h.b16 %v736
    %v941 = vunpack.c.l.b16 %v737
    %v942 = vunpack.c.h.b16 %v737
    %v943 = vunpack.c.l.b16 %v738
    %v944 = vunpack.c.h.b16 %v738
    %v945 = vunpack.c.l.b16 %v739
    %v946 = vunpack.c.h.b16 %v739
    %v947 = vunpack.c.l.b16 %v740
    %v948 = vunpack.c.h.b16 %v740
    %v949 = vunpack.c.l.b16 %v741
    %v950 = vunpack.c.h.b16 %v741
    %v951 = vunpack.c.l.b16 %v742
    %v952 = vunpack.c.h.b16 %v742
    %v953 = vunpack.c.l.b16 %v743
    %v954 = vunpack.c.h.b16 %v743
    %v955 = vunpack.c.l.b16 %v744
    %v956 = vunpack.c.h.b16 %v744
    %v957 = vunpack.c.l.b16 %v745
    %v958 = vunpack.c.h.b16 %v745
    %v959 = vpack.c.b16 %v835, %v831
    %v960 = vpack.c.b16 %v836, %v832
    %v961 = vpack.c.b16 %v837, %v833
    %v962 = vpack.c.b16 %v838, %v834
    %v963 = vpack.c.b16 %v843, %v839
    %v964 = vpack.c.b16 %v844, %v840
    %v965 = vpack.c.b16 %v845, %v841
    %v966 = vpack.c.b16 %v846, %v842
    %v967 = vpack.c.b16 %v851, %v847
    %v968 = vpack.c.b16 %v852, %v848
    %v969 = vpack.c.b16 %v853, %v849
    %v970 = vpack.c.b16 %v854, %v850
    %v971 = vpack.c.b16 %v859, %v855
    %v972 = vpack.c.b16 %v860, %v856
    %v973 = vpack.c.b16 %v861, %v857
    %v974 = vpack.c.b16 %v862, %v858
    %v975 = vpack.c.b16 %v867, %v863
    %v976 = vpack.c.b16 %v868, %v864
    %v977 = vpack.c.b16 %v869, %v865
    %v978 = vpack.c.b16 %v870, %v866
    %v979 = vpack.c.b16 %v875, %v871
    %v980 = vpack.c.b16 %v876, %v872
    %v981 = vpack.c.b16 %v877, %v873
    %v982 = vpack.c.b16 %v878, %v874
    %v983 = vpack.c.b16 %v883, %v879
    %v984 = vpack.c.b16 %v884, %v880
    %v985 = vpack.c.b16 %v885, %v881
    %v986 = vpack.c.b16 %v886, %v882
    %v987 = vpack.c.b16 %v891, %v887
    %v988 = vpack.c.b16 %v892, %v888
    %v989 = vpack.c.b16 %v893, %v889
    %v990 = vpack.c.b16 %v894, %v890
    %v991 = vpack.c.b16 %v899, %v895
    %v992 = vpack.c.b16 %v900, %v896
    %v993 = vpack.c.b16 %v901, %v897
    %v994 = vpack.c.b16 %v902, %v898
    %v995 = vpack.c.b16 %v907, %v903
    %v996 = vpack.c.b16 %v908, %v904
    %v997 = vpack.c.b16 %v909, %v905
    %v998 = vpack.c.b16 %v910, %v906
    %v999 = vpack.c.b16 %v915, %v911
    %v1000 = vpack.c.b16 %v916, %v912
    %v1001 = vpack.c.b16 %v917, %v913
    %v1002 = vpack.c.b16 %v918, %v914
    %v1003 = vpack.c.b16 %v923, %v919
    %v1004 = vpack.c.b16 %v924, %v920
    %v1005 = vpack.c.b16 %v925, %v921
    %v1006 = vpack.c.b16 %v926, %v922
    %v1007 = vpack.c.b16 %v931, %v927
    %v1008 = vpack.c.b16 %v932, %v928
    %v1009 = vpack.c.b16 %v933, %v929
    %v1010 = vpack.c.b16 %v934, %v930
    %v1011 = vpack.c.b16 %v939, %v935
    %v1012 = vpack.c.b16 %v940, %v936
    %v1013 = vpack.c.b16 %v941, %v937
    %v1014 = vpack.c.b16 %v942, %v938
    %v1015 = vpack.c.b16 %v947, %v943
    %v1016 = vpack.c.b16 %v948, %v944
    %v1017 = vpack.c.b16 %v949, %v945
    %v1018 = vpack.c.b16 %v950, %v946
    %v1019 = vpack.c.b16 %v955, %v951
    %v1020 = vpack.c.b16 %v956, %v952
    %v1021 = vpack.c.b16 %v957, %v953
    %v1022 = vpack.c.b16 %v958, %v954
    %1087 = vmatprep.subr.bf16.mxu0 %v960
    %1088 = vmatpush1.bf16.msra.mxu0 %v959
    %1089 = vmatprep.subr.bf16.mxu0 %v964
    %1090 = vmatpush1.bf16.msra.mxu0 %v963
    %1091 = vmatprep.subr.bf16.mxu0 %v968
    %1092 = vmatpush1.bf16.msra.mxu0 %v967
    %1093 = vmatprep.subr.bf16.mxu0 %v972
    %1094 = vmatpush1.bf16.msra.mxu0 %v971
    %1095 = vmatprep.subr.bf16.mxu0 %v976
    %1096 = vmatpush1.bf16.msra.mxu0 %v975
    %1097 = vmatprep.subr.bf16.mxu0 %v980
    %1098 = vmatpush1.bf16.msra.mxu0 %v979
    %1099 = vmatprep.subr.bf16.mxu0 %v984
    %1100 = vmatpush1.bf16.msra.mxu0 %v983
    %1101 = vmatprep.subr.bf16.mxu0 %v988
    %1102 = vmatpush1.bf16.msra.mxu0 %v987
    %1103 = vmatprep.subr.bf16.mxu0 %v992
    %1104 = vmatpush1.bf16.msra.mxu0 %v991
    %1105 = vmatprep.subr.bf16.mxu0 %v996
    %1106 = vmatpush1.bf16.msra.mxu0 %v995
    %1107 = vmatprep.subr.bf16.mxu0 %v1000
    %1108 = vmatpush1.bf16.msra.mxu0 %v999
    %1109 = vmatprep.subr.bf16.mxu0 %v1004
    %1110 = vmatpush1.bf16.msra.mxu0 %v1003
    %1111 = vmatprep.subr.bf16.mxu0 %v1008
    %1112 = vmatpush1.bf16.msra.mxu0 %v1007
    %1113 = vmatprep.subr.bf16.mxu0 %v1012
    %1114 = vmatpush1.bf16.msra.mxu0 %v1011
    %1115 = vmatprep.subr.bf16.mxu0 %v1016
    %1116 = vmatpush1.bf16.msra.mxu0 %v1015
    %1117 = vmatprep.subr.bf16.mxu0 %v1020
    %1118 = vmatpush1.bf16.msra.mxu0 %v1019
    %1119 = vmatprep.mubr.bf16.mxu0 %v681
    %1120 = vmatmul.mubr.bf16.gmra.mrb[0].mxu0 %v680
    %v1121 = vpop.f32.mrb[0].mxu0
    %v1122 = vadd.f32 %v750, %v1121
    %v1123 = vpop.f32.mrb[0].mxu0
    %v1124 = vadd.f32 %v754, %v1123
    %v1125 = vpop.f32.mrb[0].mxu0
    %v1126 = vadd.f32 %v750, %v1125
    %v1127 = vpop.f32.mrb[0].mxu0
    %v1128 = vadd.f32 %v754, %v1127
    %1129 = vdwg.mxu0
    %1130 = vmatprep.subr.bf16.mxu0 %v962
    %1131 = vmatpush1.bf16.msra.mxu0 %v961
    %1132 = vmatprep.subr.bf16.mxu0 %v966
    %1133 = vmatpush1.bf16.msra.mxu0 %v965
    %1134 = vmatprep.subr.bf16.mxu0 %v970
    %1135 = vmatpush1.bf16.msra.mxu0 %v969
    %1136 = vmatprep.subr.bf16.mxu0 %v974
    %1137 = vmatpush1.bf16.msra.mxu0 %v973
    %1138 = vmatprep.subr.bf16.mxu0 %v978
    %1139 = vmatpush1.bf16.msra.mxu0 %v977
    %1140 = vmatprep.subr.bf16.mxu0 %v982
    %1141 = vmatpush1.bf16.msra.mxu0 %v981
    %1142 = vmatprep.subr.bf16.mxu0 %v986
    %1143 = vmatpush1.bf16.msra.mxu0 %v985
    %1144 = vmatprep.subr.bf16.mxu0 %v990
    %1145 = vmatpush1.bf16.msra.mxu0 %v989
    %1146 = vmatprep.subr.bf16.mxu0 %v994
    %1147 = vmatpush1.bf16.msra.mxu0 %v993
    %1148 = vmatprep.subr.bf16.mxu0 %v998
    %1149 = vmatpush1.bf16.msra.mxu0 %v997
    %1150 = vmatprep.subr.bf16.mxu0 %v1002
    %1151 = vmatpush1.bf16.msra.mxu0 %v1001
    %1152 = vmatprep.subr.bf16.mxu0 %v1006
    %1153 = vmatpush1.bf16.msra.mxu0 %v1005
    %1154 = vmatprep.subr.bf16.mxu0 %v1010
    %1155 = vmatpush1.bf16.msra.mxu0 %v1009
    %1156 = vmatprep.subr.bf16.mxu0 %v1014
    %1157 = vmatpush1.bf16.msra.mxu0 %v1013
    %1158 = vmatprep.subr.bf16.mxu0 %v1018
    %1159 = vmatpush1.bf16.msra.mxu0 %v1017
    %1160 = vmatprep.subr.bf16.mxu0 %v1022
    %1161 = vmatpush1.bf16.msra.mxu0 %v1021
    %1162 = vmatprep.mubr.bf16.mxu0 %v681
    %1163 = vmatmul.mubr.bf16.gmra.mrb[0].mxu0 %v680
    %v1164 = vpop.f32.mrb[0].mxu0
    %v1165 = vadd.f32 %v758, %v1164
    %v1166 = vpop.f32.mrb[0].mxu0
    %v1167 = vadd.f32 %v762, %v1166
    %v1168 = vpop.f32.mrb[0].mxu0
    %v1169 = vadd.f32 %v758, %v1168
    %v1170 = vpop.f32.mrb[0].mxu0
    %v1171 = vadd.f32 %v762, %v1170
    %1172 = vdwg.mxu0
    %v1173 = vld [vmem:[#allocation5] sm:$0xff]
    %v1174 = vld [vmem:[#allocation5 + $0x8] sm:$0xff]
    %v1175 = vxor.u32 %v1122, 2147483648
    %v1176 = vxor.u32 %v1126, 2147483648
    %v1177 = vmul.f32 %v1175, 1.442695
    %v1178 = vpow.pop %v1177
    %v1179 = vmul.f32 %v1176, 1.442695
    %v1180 = vpow.pop %v1179
    %v1181 = vadd.f32 %v1178, 1.0
    %v1182 = vadd.f32 %v1180, 1.0
    %v1183 = vrcp.pop %v1181
    %v1184 = vmul.f32 1.0, %v1183
    %v1185 = vrcp.pop %v1182
    %v1186 = vmul.f32 1.0, %v1185
    %v1187 = vxor.u32 %v1124, 2147483648
    %v1188 = vxor.u32 %v1128, 2147483648
    %v1189 = vmul.f32 %v1187, 1.442695
    %v1190 = vpow.pop %v1189
    %v1191 = vmul.f32 %v1188, 1.442695
    %v1192 = vpow.pop %v1191
    %v1193 = vadd.f32 %v1190, 1.0
    %v1194 = vadd.f32 %v1192, 1.0
    %v1195 = vrcp.pop %v1193
    %v1196 = vmul.f32 1.0, %v1195
    %v1197 = vrcp.pop %v1194
    %v1198 = vmul.f32 1.0, %v1197
    %v1199 = vtanh.pop %v1165
    %v1200 = vtanh.pop %v1169
    %v1201 = vxor.u32 %v1167, 2147483648
    %v1202 = vxor.u32 %v1171, 2147483648
    %v1203 = vmul.f32 %v1201, 1.442695
    %v1204 = vpow.pop %v1203
    %v1205 = vmul.f32 %v1202, 1.442695
    %v1206 = vpow.pop %v1205
    %v1207 = vadd.f32 %v1204, 1.0
    %v1208 = vadd.f32 %v1206, 1.0
    %v1209 = vrcp.pop %v1207
    %v1210 = vmul.f32 1.0, %v1209
    %v1211 = vrcp.pop %v1208
    %v1212 = vmul.f32 1.0, %v1211
    %v1213 = vmul.f32 %v1196, %v1173
    %v1214 = vmul.f32 %v1198, %v1174
    %v1215 = vmul.f32 %v1184, %v1199
    %v1216 = vmul.f32 %v1186, %v1200
    %v1217 = vadd.f32 %v1213, %v1215
    %v1218 = vadd.f32 %v1214, %v1216
    %v1219 = vtanh.pop %v1217
    %v1220 = vtanh.pop %v1218
    %v1221 = vmul.f32 %v1210, %v1219
    %v1222 = vmul.f32 %v1212, %v1220
    %1223 = vst [vmem:[#allocation5] sm:$0xff] %v1217
    %1224 = vst [vmem:[#allocation5 + $0x8] sm:$0xff] %v1218
    %v1225 = vpack.c.bf16 %v1222, %v1221
    %1226 = vst [vmem:[#allocation3] sm:$0xff] %v1225
    %1227 = vst [vmem:[#allocation2 + $0x8] sm:$0xff] %v1225
    %v1228 = vld [vmem:[#allocation3] sm:$0xff]
    %v1229 = vld [vmem:[#allocation3 + $0x8] sm:$0xff]
    %v1230 = vld [vmem:[%s5] sm:$0xff]
    %v1231 = vld [vmem:[%s5 + $0x8] sm:$0xff]
    %v1232 = vld [vmem:[%s5 + $0x10] sm:$0xff]
    %v1233 = vld [vmem:[%s5 + $0x18] sm:$0xff]
    %v1234 = vld [vmem:[%s5 + $0x20] sm:$0xff]
    %v1235 = vld [vmem:[%s5 + $0x28] sm:$0xff]
    %v1236 = vld [vmem:[%s5 + $0x30] sm:$0xff]
    %v1237 = vld [vmem:[%s5 + $0x38] sm:$0xff]
    %v1238 = vld [vmem:[%s5 + $0x40] sm:$0xff]
    %v1239 = vld [vmem:[%s5 + $0x48] sm:$0xff]
    %v1240 = vld [vmem:[%s5 + $0x50] sm:$0xff]
    %v1241 = vld [vmem:[%s5 + $0x58] sm:$0xff]
    %v1242 = vld [vmem:[%s5 + $0x60] sm:$0xff]
    %v1243 = vld [vmem:[%s5 + $0x68] sm:$0xff]
    %v1244 = vld [vmem:[%s5 + $0x70] sm:$0xff]
    %v1245 = vld [vmem:[%s5 + $0x78] sm:$0xff]
    %v1246 = vld [vmem:[%s5 + $0x80] sm:$0xff]
    %v1247 = vld [vmem:[%s5 + $0x88] sm:$0xff]
    %v1248 = vld [vmem:[%s5 + $0x90] sm:$0xff]
    %v1249 = vld [vmem:[%s5 + $0x98] sm:$0xff]
    %v1250 = vld [vmem:[%s5 + $0xa0] sm:$0xff]
    %v1251 = vld [vmem:[%s5 + $0xa8] sm:$0xff]
    %v1252 = vld [vmem:[%s5 + $0xb0] sm:$0xff]
    %v1253 = vld [vmem:[%s5 + $0xb8] sm:$0xff]
    %v1254 = vld [vmem:[%s5 + $0xc0] sm:$0xff]
    %v1255 = vld [vmem:[%s5 + $0xc8] sm:$0xff]
    %v1256 = vld [vmem:[%s5 + $0xd0] sm:$0xff]
    %v1257 = vld [vmem:[%s5 + $0xd8] sm:$0xff]
    %v1258 = vld [vmem:[%s5 + $0xe0] sm:$0xff]
    %v1259 = vld [vmem:[%s5 + $0xe8] sm:$0xff]
    %v1260 = vld [vmem:[%s5 + $0xf0] sm:$0xff]
    %v1261 = vld [vmem:[%s5 + $0xf8] sm:$0xff]
    %v1262 = vld [vmem:[%s5 + $0x100] sm:$0xff]
    %v1263 = vld [vmem:[%s5 + $0x108] sm:$0xff]
    %v1264 = vld [vmem:[%s5 + $0x110] sm:$0xff]
    %v1265 = vld [vmem:[%s5 + $0x118] sm:$0xff]
    %v1266 = vld [vmem:[%s5 + $0x120] sm:$0xff]
    %v1267 = vld [vmem:[%s5 + $0x128] sm:$0xff]
    %v1268 = vld [vmem:[%s5 + $0x130] sm:$0xff]
    %v1269 = vld [vmem:[%s5 + $0x138] sm:$0xff]
    %v1270 = vld [vmem:[%s5 + $0x140] sm:$0xff]
    %v1271 = vld [vmem:[%s5 + $0x148] sm:$0xff]
    %v1272 = vld [vmem:[%s5 + $0x150] sm:$0xff]
    %v1273 = vld [vmem:[%s5 + $0x158] sm:$0xff]
    %v1274 = vld [vmem:[%s5 + $0x160] sm:$0xff]
    %v1275 = vld [vmem:[%s5 + $0x168] sm:$0xff]
    %v1276 = vld [vmem:[%s5 + $0x170] sm:$0xff]
    %v1277 = vld [vmem:[%s5 + $0x178] sm:$0xff]
    %v1278 = vld [vmem:[%s5 + $0x180] sm:$0xff]
    %v1279 = vld [vmem:[%s5 + $0x188] sm:$0xff]
    %v1280 = vld [vmem:[%s5 + $0x190] sm:$0xff]
    %v1281 = vld [vmem:[%s5 + $0x198] sm:$0xff]
    %v1282 = vld [vmem:[%s5 + $0x1a0] sm:$0xff]
    %v1283 = vld [vmem:[%s5 + $0x1a8] sm:$0xff]
    %v1284 = vld [vmem:[%s5 + $0x1b0] sm:$0xff]
    %v1285 = vld [vmem:[%s5 + $0x1b8] sm:$0xff]
    %v1286 = vld [vmem:[%s5 + $0x1c0] sm:$0xff]
    %v1287 = vld [vmem:[%s5 + $0x1c8] sm:$0xff]
    %v1288 = vld [vmem:[%s5 + $0x1d0] sm:$0xff]
    %v1289 = vld [vmem:[%s5 + $0x1d8] sm:$0xff]
    %v1290 = vld [vmem:[%s5 + $0x1e0] sm:$0xff]
    %v1291 = vld [vmem:[%s5 + $0x1e8] sm:$0xff]
    %v1292 = vld [vmem:[%s5 + $0x1f0] sm:$0xff]
    %v1293 = vld [vmem:[%s5 + $0x1f8] sm:$0xff]
    %v1295 = vlaneseq
    %v1296 = vshrl.u32 %v1295, 7
    %v1297 = vsub.s32 0, %v1296
    %v1298 = vrot.slane %v44, %v1297
    %v1299 = vlaneseq
    %v1300 = vshrl.u32 %v1299, 7
    %v1301 = vsub.s32 1, %v1300
    %v1302 = vrot.slane %v44, %v1301
    %v1303 = vlaneseq
    %v1304 = vshrl.u32 %v1303, 7
    %v1305 = vsub.s32 2, %v1304
    %v1306 = vrot.slane %v44, %v1305
    %v1307 = vlaneseq
    %v1308 = vshrl.u32 %v1307, 7
    %v1309 = vsub.s32 3, %v1308
    %v1310 = vrot.slane %v44, %v1309
    %v1379 = vunpack.c.l.b16 %v1230
    %v1380 = vunpack.c.h.b16 %v1230
    %v1381 = vunpack.c.l.b16 %v1231
    %v1382 = vunpack.c.h.b16 %v1231
    %v1383 = vunpack.c.l.b16 %v1232
    %v1384 = vunpack.c.h.b16 %v1232
    %v1385 = vunpack.c.l.b16 %v1233
    %v1386 = vunpack.c.h.b16 %v1233
    %v1387 = vunpack.c.l.b16 %v1234
    %v1388 = vunpack.c.h.b16 %v1234
    %v1389 = vunpack.c.l.b16 %v1235
    %v1390 = vunpack.c.h.b16 %v1235
    %v1391 = vunpack.c.l.b16 %v1236
    %v1392 = vunpack.c.h.b16 %v1236
    %v1393 = vunpack.c.l.b16 %v1237
    %v1394 = vunpack.c.h.b16 %v1237
    %v1395 = vunpack.c.l.b16 %v1238
    %v1396 = vunpack.c.h.b16 %v1238
    %v1397 = vunpack.c.l.b16 %v1239
    %v1398 = vunpack.c.h.b16 %v1239
    %v1399 = vunpack.c.l.b16 %v1240
    %v1400 = vunpack.c.h.b16 %v1240
    %v1401 = vunpack.c.l.b16 %v1241
    %v1402 = vunpack.c.h.b16 %v1241
    %v1403 = vunpack.c.l.b16 %v1242
    %v1404 = vunpack.c.h.b16 %v1242
    %v1405 = vunpack.c.l.b16 %v1243
    %v1406 = vunpack.c.h.b16 %v1243
    %v1407 = vunpack.c.l.b16 %v1244
    %v1408 = vunpack.c.h.b16 %v1244
    %v1409 = vunpack.c.l.b16 %v1245
    %v1410 = vunpack.c.h.b16 %v1245
    %v1411 = vunpack.c.l.b16 %v1246
    %v1412 = vunpack.c.h.b16 %v1246
    %v1413 = vunpack.c.l.b16 %v1247
    %v1414 = vunpack.c.h.b16 %v1247
    %v1415 = vunpack.c.l.b16 %v1248
    %v1416 = vunpack.c.h.b16 %v1248
    %v1417 = vunpack.c.l.b16 %v1249
    %v1418 = vunpack.c.h.b16 %v1249
    %v1419 = vunpack.c.l.b16 %v1250
    %v1420 = vunpack.c.h.b16 %v1250
    %v1421 = vunpack.c.l.b16 %v1251
    %v1422 = vunpack.c.h.b16 %v1251
    %v1423 = vunpack.c.l.b16 %v1252
    %v1424 = vunpack.c.h.b16 %v1252
    %v1425 = vunpack.c.l.b16 %v1253
    %v1426 = vunpack.c.h.b16 %v1253
    %v1427 = vunpack.c.l.b16 %v1254
    %v1428 = vunpack.c.h.b16 %v1254
    %v1429 = vunpack.c.l.b16 %v1255
    %v1430 = vunpack.c.h.b16 %v1255
    %v1431 = vunpack.c.l.b16 %v1256
    %v1432 = vunpack.c.h.b16 %v1256
    %v1433 = vunpack.c.l.b16 %v1257
    %v1434 = vunpack.c.h.b16 %v1257
    %v1435 = vunpack.c.l.b16 %v1258
    %v1436 = vunpack.c.h.b16 %v1258
    %v1437 = vunpack.c.l.b16 %v1259
    %v1438 = vunpack.c.h.b16 %v1259
    %v1439 = vunpack.c.l.b16 %v1260
    %v1440 = vunpack.c.h.b16 %v1260
    %v1441 = vunpack.c.l.b16 %v1261
    %v1442 = vunpack.c.h.b16 %v1261
    %v1443 = vunpack.c.l.b16 %v1262
    %v1444 = vunpack.c.h.b16 %v1262
    %v1445 = vunpack.c.l.b16 %v1263
    %v1446 = vunpack.c.h.b16 %v1263
    %v1447 = vunpack.c.l.b16 %v1264
    %v1448 = vunpack.c.h.b16 %v1264
    %v1449 = vunpack.c.l.b16 %v1265
    %v1450 = vunpack.c.h.b16 %v1265
    %v1451 = vunpack.c.l.b16 %v1266
    %v1452 = vunpack.c.h.b16 %v1266
    %v1453 = vunpack.c.l.b16 %v1267
    %v1454 = vunpack.c.h.b16 %v1267
    %v1455 = vunpack.c.l.b16 %v1268
    %v1456 = vunpack.c.h.b16 %v1268
    %v1457 = vunpack.c.l.b16 %v1269
    %v1458 = vunpack.c.h.b16 %v1269
    %v1459 = vunpack.c.l.b16 %v1270
    %v1460 = vunpack.c.h.b16 %v1270
    %v1461 = vunpack.c.l.b16 %v1271
    %v1462 = vunpack.c.h.b16 %v1271
    %v1463 = vunpack.c.l.b16 %v1272
    %v1464 = vunpack.c.h.b16 %v1272
    %v1465 = vunpack.c.l.b16 %v1273
    %v1466 = vunpack.c.h.b16 %v1273
    %v1467 = vunpack.c.l.b16 %v1274
    %v1468 = vunpack.c.h.b16 %v1274
    %v1469 = vunpack.c.l.b16 %v1275
    %v1470 = vunpack.c.h.b16 %v1275
    %v1471 = vunpack.c.l.b16 %v1276
    %v1472 = vunpack.c.h.b16 %v1276
    %v1473 = vunpack.c.l.b16 %v1277
    %v1474 = vunpack.c.h.b16 %v1277
    %v1475 = vunpack.c.l.b16 %v1278
    %v1476 = vunpack.c.h.b16 %v1278
    %v1477 = vunpack.c.l.b16 %v1279
    %v1478 = vunpack.c.h.b16 %v1279
    %v1479 = vunpack.c.l.b16 %v1280
    %v1480 = vunpack.c.h.b16 %v1280
    %v1481 = vunpack.c.l.b16 %v1281
    %v1482 = vunpack.c.h.b16 %v1281
    %v1483 = vunpack.c.l.b16 %v1282
    %v1484 = vunpack.c.h.b16 %v1282
    %v1485 = vunpack.c.l.b16 %v1283
    %v1486 = vunpack.c.h.b16 %v1283
    %v1487 = vunpack.c.l.b16 %v1284
    %v1488 = vunpack.c.h.b16 %v1284
    %v1489 = vunpack.c.l.b16 %v1285
    %v1490 = vunpack.c.h.b16 %v1285
    %v1491 = vunpack.c.l.b16 %v1286
    %v1492 = vunpack.c.h.b16 %v1286
    %v1493 = vunpack.c.l.b16 %v1287
    %v1494 = vunpack.c.h.b16 %v1287
    %v1495 = vunpack.c.l.b16 %v1288
    %v1496 = vunpack.c.h.b16 %v1288
    %v1497 = vunpack.c.l.b16 %v1289
    %v1498 = vunpack.c.h.b16 %v1289
    %v1499 = vunpack.c.l.b16 %v1290
    %v1500 = vunpack.c.h.b16 %v1290
    %v1501 = vunpack.c.l.b16 %v1291
    %v1502 = vunpack.c.h.b16 %v1291
    %v1503 = vunpack.c.l.b16 %v1292
    %v1504 = vunpack.c.h.b16 %v1292
    %v1505 = vunpack.c.l.b16 %v1293
    %v1506 = vunpack.c.h.b16 %v1293
    %v1507 = vpack.c.b16 %v1383, %v1379
    %v1508 = vpack.c.b16 %v1384, %v1380
    %v1509 = vpack.c.b16 %v1385, %v1381
    %v1510 = vpack.c.b16 %v1386, %v1382
    %v1511 = vpack.c.b16 %v1391, %v1387
    %v1512 = vpack.c.b16 %v1392, %v1388
    %v1513 = vpack.c.b16 %v1393, %v1389
    %v1514 = vpack.c.b16 %v1394, %v1390
    %v1515 = vpack.c.b16 %v1399, %v1395
    %v1516 = vpack.c.b16 %v1400, %v1396
    %v1517 = vpack.c.b16 %v1401, %v1397
    %v1518 = vpack.c.b16 %v1402, %v1398
    %v1519 = vpack.c.b16 %v1407, %v1403
    %v1520 = vpack.c.b16 %v1408, %v1404
    %v1521 = vpack.c.b16 %v1409, %v1405
    %v1522 = vpack.c.b16 %v1410, %v1406
    %v1523 = vpack.c.b16 %v1415, %v1411
    %v1524 = vpack.c.b16 %v1416, %v1412
    %v1525 = vpack.c.b16 %v1417, %v1413
    %v1526 = vpack.c.b16 %v1418, %v1414
    %v1527 = vpack.c.b16 %v1423, %v1419
    %v1528 = vpack.c.b16 %v1424, %v1420
    %v1529 = vpack.c.b16 %v1425, %v1421
    %v1530 = vpack.c.b16 %v1426, %v1422
    %v1531 = vpack.c.b16 %v1431, %v1427
    %v1532 = vpack.c.b16 %v1432, %v1428
    %v1533 = vpack.c.b16 %v1433, %v1429
    %v1534 = vpack.c.b16 %v1434, %v1430
    %v1535 = vpack.c.b16 %v1439, %v1435
    %v1536 = vpack.c.b16 %v1440, %v1436
    %v1537 = vpack.c.b16 %v1441, %v1437
    %v1538 = vpack.c.b16 %v1442, %v1438
    %v1539 = vpack.c.b16 %v1447, %v1443
    %v1540 = vpack.c.b16 %v1448, %v1444
    %v1541 = vpack.c.b16 %v1449, %v1445
    %v1542 = vpack.c.b16 %v1450, %v1446
    %v1543 = vpack.c.b16 %v1455, %v1451
    %v1544 = vpack.c.b16 %v1456, %v1452
    %v1545 = vpack.c.b16 %v1457, %v1453
    %v1546 = vpack.c.b16 %v1458, %v1454
    %v1547 = vpack.c.b16 %v1463, %v1459
    %v1548 = vpack.c.b16 %v1464, %v1460
    %v1549 = vpack.c.b16 %v1465, %v1461
    %v1550 = vpack.c.b16 %v1466, %v1462
    %v1551 = vpack.c.b16 %v1471, %v1467
    %v1552 = vpack.c.b16 %v1472, %v1468
    %v1553 = vpack.c.b16 %v1473, %v1469
    %v1554 = vpack.c.b16 %v1474, %v1470
    %v1555 = vpack.c.b16 %v1479, %v1475
    %v1556 = vpack.c.b16 %v1480, %v1476
    %v1557 = vpack.c.b16 %v1481, %v1477
    %v1558 = vpack.c.b16 %v1482, %v1478
    %v1559 = vpack.c.b16 %v1487, %v1483
    %v1560 = vpack.c.b16 %v1488, %v1484
    %v1561 = vpack.c.b16 %v1489, %v1485
    %v1562 = vpack.c.b16 %v1490, %v1486
    %v1563 = vpack.c.b16 %v1495, %v1491
    %v1564 = vpack.c.b16 %v1496, %v1492
    %v1565 = vpack.c.b16 %v1497, %v1493
    %v1566 = vpack.c.b16 %v1498, %v1494
    %v1567 = vpack.c.b16 %v1503, %v1499
    %v1568 = vpack.c.b16 %v1504, %v1500
    %v1569 = vpack.c.b16 %v1505, %v1501
    %v1570 = vpack.c.b16 %v1506, %v1502
    %1635 = vmatprep.subr.bf16.mxu0 %v1508
    %1636 = vmatpush1.bf16.msra.mxu0 %v1507
    %1637 = vmatprep.subr.bf16.mxu0 %v1512
    %1638 = vmatpush1.bf16.msra.mxu0 %v1511
    %1639 = vmatprep.subr.bf16.mxu0 %v1516
    %1640 = vmatpush1.bf16.msra.mxu0 %v1515
    %1641 = vmatprep.subr.bf16.mxu0 %v1520
    %1642 = vmatpush1.bf16.msra.mxu0 %v1519
    %1643 = vmatprep.subr.bf16.mxu0 %v1524
    %1644 = vmatpush1.bf16.msra.mxu0 %v1523
    %1645 = vmatprep.subr.bf16.mxu0 %v1528
    %1646 = vmatpush1.bf16.msra.mxu0 %v1527
    %1647 = vmatprep.subr.bf16.mxu0 %v1532
    %1648 = vmatpush1.bf16.msra.mxu0 %v1531
    %1649 = vmatprep.subr.bf16.mxu0 %v1536
    %1650 = vmatpush1.bf16.msra.mxu0 %v1535
    %1651 = vmatprep.subr.bf16.mxu0 %v1540
    %1652 = vmatpush1.bf16.msra.mxu0 %v1539
    %1653 = vmatprep.subr.bf16.mxu0 %v1544
    %1654 = vmatpush1.bf16.msra.mxu0 %v1543
    %1655 = vmatprep.subr.bf16.mxu0 %v1548
    %1656 = vmatpush1.bf16.msra.mxu0 %v1547
    %1657 = vmatprep.subr.bf16.mxu0 %v1552
    %1658 = vmatpush1.bf16.msra.mxu0 %v1551
    %1659 = vmatprep.subr.bf16.mxu0 %v1556
    %1660 = vmatpush1.bf16.msra.mxu0 %v1555
    %1661 = vmatprep.subr.bf16.mxu0 %v1560
    %1662 = vmatpush1.bf16.msra.mxu0 %v1559
    %1663 = vmatprep.subr.bf16.mxu0 %v1564
    %1664 = vmatpush1.bf16.msra.mxu0 %v1563
    %1665 = vmatprep.subr.bf16.mxu0 %v1568
    %1666 = vmatpush1.bf16.msra.mxu0 %v1567
    %1667 = vmatprep.mubr.bf16.mxu0 %v1229
    %1668 = vmatmul.mubr.bf16.gmra.mrb[0].mxu0 %v1228
    %v1669 = vpop.f32.mrb[0].mxu0
    %v1670 = vadd.f32 %v1298, %v1669
    %v1671 = vpop.f32.mrb[0].mxu0
    %v1672 = vadd.f32 %v1302, %v1671
    %v1673 = vpop.f32.mrb[0].mxu0
    %v1674 = vadd.f32 %v1298, %v1673
    %v1675 = vpop.f32.mrb[0].mxu0
    %v1676 = vadd.f32 %v1302, %v1675
    %1677 = vdwg.mxu0
    %1678 = vmatprep.subr.bf16.mxu0 %v1510
    %1679 = vmatpush1.bf16.msra.mxu0 %v1509
    %1680 = vmatprep.subr.bf16.mxu0 %v1514
    %1681 = vmatpush1.bf16.msra.mxu0 %v1513
    %1682 = vmatprep.subr.bf16.mxu0 %v1518
    %1683 = vmatpush1.bf16.msra.mxu0 %v1517
    %1684 = vmatprep.subr.bf16.mxu0 %v1522
    %1685 = vmatpush1.bf16.msra.mxu0 %v1521
    %1686 = vmatprep.subr.bf16.mxu0 %v1526
    %1687 = vmatpush1.bf16.msra.mxu0 %v1525
    %1688 = vmatprep.subr.bf16.mxu0 %v1530
    %1689 = vmatpush1.bf16.msra.mxu0 %v1529
    %1690 = vmatprep.subr.bf16.mxu0 %v1534
    %1691 = vmatpush1.bf16.msra.mxu0 %v1533
    %1692 = vmatprep.subr.bf16.mxu0 %v1538
    %1693 = vmatpush1.bf16.msra.mxu0 %v1537
    %1694 = vmatprep.subr.bf16.mxu0 %v1542
    %1695 = vmatpush1.bf16.msra.mxu0 %v1541
    %1696 = vmatprep.subr.bf16.mxu0 %v1546
    %1697 = vmatpush1.bf16.msra.mxu0 %v1545
    %1698 = vmatprep.subr.bf16.mxu0 %v1550
    %1699 = vmatpush1.bf16.msra.mxu0 %v1549
    %1700 = vmatprep.subr.bf16.mxu0 %v1554
    %1701 = vmatpush1.bf16.msra.mxu0 %v1553
    %1702 = vmatprep.subr.bf16.mxu0 %v1558
    %1703 = vmatpush1.bf16.msra.mxu0 %v1557
    %1704 = vmatprep.subr.bf16.mxu0 %v1562
    %1705 = vmatpush1.bf16.msra.mxu0 %v1561
    %1706 = vmatprep.subr.bf16.mxu0 %v1566
    %1707 = vmatpush1.bf16.msra.mxu0 %v1565
    %1708 = vmatprep.subr.bf16.mxu0 %v1570
    %1709 = vmatpush1.bf16.msra.mxu0 %v1569
    %1710 = vmatprep.mubr.bf16.mxu0 %v1229
    %1711 = vmatmul.mubr.bf16.gmra.mrb[0].mxu0 %v1228
    %v1712 = vpop.f32.mrb[0].mxu0
    %v1713 = vadd.f32 %v1306, %v1712
    %v1714 = vpop.f32.mrb[0].mxu0
    %v1715 = vadd.f32 %v1310, %v1714
    %v1716 = vpop.f32.mrb[0].mxu0
    %v1717 = vadd.f32 %v1306, %v1716
    %v1718 = vpop.f32.mrb[0].mxu0
    %v1719 = vadd.f32 %v1310, %v1718
    %1720 = vdwg.mxu0
    %v1721 = vld [vmem:[#allocation6] sm:$0xff]
    %v1722 = vld [vmem:[#allocation6 + $0x8] sm:$0xff]
    %v1723 = vxor.u32 %v1670, 2147483648
    %v1724 = vxor.u32 %v1674, 2147483648
    %v1725 = vmul.f32 %v1723, 1.442695
    %v1726 = vpow.pop %v1725
    %v1727 = vmul.f32 %v1724, 1.442695
    %v1728 = vpow.pop %v1727
    %v1729 = vadd.f32 %v1726, 1.0
    %v1730 = vadd.f32 %v1728, 1.0
    %v1731 = vrcp.pop %v1729
    %v1732 = vmul.f32 1.0, %v1731
    %v1733 = vrcp.pop %v1730
    %v1734 = vmul.f32 1.0, %v1733
    %v1735 = vxor.u32 %v1672, 2147483648
    %v1736 = vxor.u32 %v1676, 2147483648
    %v1737 = vmul.f32 %v1735, 1.442695
    %v1738 = vpow.pop %v1737
    %v1739 = vmul.f32 %v1736, 1.442695
    %v1740 = vpow.pop %v1739
    %v1741 = vadd.f32 %v1738, 1.0
    %v1742 = vadd.f32 %v1740, 1.0
    %v1743 = vrcp.pop %v1741
    %v1744 = vmul.f32 1.0, %v1743
    %v1745 = vrcp.pop %v1742
    %v1746 = vmul.f32 1.0, %v1745
    %v1747 = vtanh.pop %v1713
    %v1748 = vtanh.pop %v1717
    %v1749 = vxor.u32 %v1715, 2147483648
    %v1750 = vxor.u32 %v1719, 2147483648
    %v1751 = vmul.f32 %v1749, 1.442695
    %v1752 = vpow.pop %v1751
    %v1753 = vmul.f32 %v1750, 1.442695
    %v1754 = vpow.pop %v1753
    %v1755 = vadd.f32 %v1752, 1.0
    %v1756 = vadd.f32 %v1754, 1.0
    %v1757 = vrcp.pop %v1755
    %v1758 = vmul.f32 1.0, %v1757
    %v1759 = vrcp.pop %v1756
    %v1760 = vmul.f32 1.0, %v1759
    %v1761 = vmul.f32 %v1744, %v1721
    %v1762 = vmul.f32 %v1746, %v1722
    %v1763 = vmul.f32 %v1732, %v1747
    %v1764 = vmul.f32 %v1734, %v1748
    %v1765 = vadd.f32 %v1761, %v1763
    %v1766 = vadd.f32 %v1762, %v1764
    %v1767 = vtanh.pop %v1765
    %v1768 = vtanh.pop %v1766
    %v1769 = vmul.f32 %v1758, %v1767
    %v1770 = vmul.f32 %v1760, %v1768
    %1771 = vst [vmem:[#allocation6] sm:$0xff] %v1765
    %1772 = vst [vmem:[#allocation6 + $0x8] sm:$0xff] %v1766
    %v1773 = vpack.c.bf16 %v1770, %v1769
    %1774 = vst [vmem:[#allocation3 + $0x8] sm:$0xff] %v1773
  $region42: #{character_language_model.1} parent=0 // loop_footer
    %s53 = sadd.s32 1, %s49
  $region43: #{character_language_model.1} parent=0 // loop_footer_branch
    %48 = sbr.rel target = $region39
  $region44: #{character_language_model.1} parent=0 // loop_exit
    _
  %v1775 = vld [vmem:[#allocation3 + $0x8] sm:$0xff]
  %v1776 = vld [vmem:[%s7] sm:$0xf]
  %v1777 = vld [vmem:[%s7 + $0x4] sm:$0xf]
  %v1778 = vld [vmem:[%s7 + $0x8] sm:$0xf]
  %v1779 = vld [vmem:[%s7 + $0xc] sm:$0xf]
  %v1780 = vld [vmem:[%s7 + $0x10] sm:$0xf]
  %v1781 = vld [vmem:[%s7 + $0x14] sm:$0xf]
  %v1782 = vld [vmem:[%s7 + $0x18] sm:$0xf]
  %v1783 = vld [vmem:[%s7 + $0x1c] sm:$0xf]
  %v1784 = vld [vmem:[%s7 + $0x20] sm:$0xf]
  %v1785 = vld [vmem:[%s7 + $0x24] sm:$0xf]
  %v1786 = vld [vmem:[%s7 + $0x28] sm:$0xf]
  %v1787 = vld [vmem:[%s7 + $0x2c] sm:$0xf]
  %v1788 = vld [vmem:[%s7 + $0x30] sm:$0xf]
  %v1789 = vld [vmem:[%s7 + $0x34] sm:$0xf]
  %v1790 = vld [vmem:[%s7 + $0x38] sm:$0xf]
  %v1791 = vld [vmem:[%s7 + $0x3c] sm:$0xf]
  %v1793 = vlaneseq
  %v1794 = vshrl.u32 %v1793, 7
  %v1795 = vsub.s32 0, %v1794
  %v1796 = vrot.slane %v45, %v1795
  %v1814 = vunpack.c.l.b16 %v1776
  %v1815 = vunpack.c.l.b16 %v1777
  %v1816 = vunpack.c.l.b16 %v1778
  %v1817 = vunpack.c.l.b16 %v1779
  %v1818 = vunpack.c.l.b16 %v1780
  %v1819 = vunpack.c.l.b16 %v1781
  %v1820 = vunpack.c.l.b16 %v1782
  %v1821 = vunpack.c.l.b16 %v1783
  %v1822 = vunpack.c.l.b16 %v1784
  %v1823 = vunpack.c.l.b16 %v1785
  %v1824 = vunpack.c.l.b16 %v1786
  %v1825 = vunpack.c.l.b16 %v1787
  %v1826 = vunpack.c.l.b16 %v1788
  %v1827 = vunpack.c.l.b16 %v1789
  %v1828 = vunpack.c.l.b16 %v1790
  %v1829 = vunpack.c.l.b16 %v1791
  %v1830 = vpack.c.b16 %v1815, %v1814
  %v1831 = vpack.c.b16 %v1817, %v1816
  %v1832 = vpack.c.b16 %v1819, %v1818
  %v1833 = vpack.c.b16 %v1821, %v1820
  %v1834 = vpack.c.b16 %v1823, %v1822
  %v1835 = vpack.c.b16 %v1825, %v1824
  %v1836 = vpack.c.b16 %v1827, %v1826
  %v1837 = vpack.c.b16 %v1829, %v1828
  %1846 = vmatprep.subr.bf16.mxu0 0
  %1847 = vmatpush1.bf16.msra.mxu0 %v1830
  %1848 = vmatprep.subr.bf16.mxu0 0
  %1849 = vmatpush1.bf16.msra.mxu0 %v1831
  %1850 = vmatprep.subr.bf16.mxu0 0
  %1851 = vmatpush1.bf16.msra.mxu0 %v1832
  %1852 = vmatprep.subr.bf16.mxu0 0
  %1853 = vmatpush1.bf16.msra.mxu0 %v1833
  %1854 = vmatprep.subr.bf16.mxu0 0
  %1855 = vmatpush1.bf16.msra.mxu0 %v1834
  %1856 = vmatprep.subr.bf16.mxu0 0
  %1857 = vmatpush1.bf16.msra.mxu0 %v1835
  %1858 = vmatprep.subr.bf16.mxu0 0
  %1859 = vmatpush1.bf16.msra.mxu0 %v1836
  %1860 = vmatprep.subr.bf16.mxu0 0
  %1861 = vmatpush1.bf16.msra.mxu0 %v1837
  %1862 = vmatprep.subr.bf16.mxu0 0
  %1863 = vmatpush1.bf16.msra.mxu0 0
  %1864 = vmatprep.subr.bf16.mxu0 0
  %1865 = vmatpush1.bf16.msra.mxu0 0
  %1866 = vmatprep.subr.bf16.mxu0 0
  %1867 = vmatpush1.bf16.msra.mxu0 0
  %1868 = vmatprep.subr.bf16.mxu0 0
  %1869 = vmatpush1.bf16.msra.mxu0 0
  %1870 = vmatprep.subr.bf16.mxu0 0
  %1871 = vmatpush1.bf16.msra.mxu0 0
  %1872 = vmatprep.subr.bf16.mxu0 0
  %1873 = vmatpush1.bf16.msra.mxu0 0
  %1874 = vmatprep.subr.bf16.mxu0 0
  %1875 = vmatpush1.bf16.msra.mxu0 0
  %1876 = vmatprep.subr.bf16.mxu0 0
  %1877 = vmatpush1.bf16.msra.mxu0 0
  %1878 = vmatprep.mubr.bf16.mxu0 0
  %1879 = vmatmul.mubr.bf16.gmra.mrb[0].mxu0 %v1775
  %v1880 = vpop.f32.mrb[0].mxu0
  %v1881 = vadd.f32 %v1796, %v1880
  %v1882 = vpop.f32.mrb[0].mxu0
  %v1883 = vpop.f32.mrb[0].mxu0
  %v1884 = vadd.f32 %v1796, %v1883
  %v1885 = vpop.f32.mrb[0].mxu0
  %1886 = vdwg.mxu0
  %1887 = vst [vmem:[%s9] sm:$0xff] %v1881
  %1888 = vst [vmem:[%s9 + $0x8] sm:$0xff] %v1884
  // Predicated region
  $region45: #{character_language_model.1} parent=0 // pred_check
    _
  $region46: #{character_language_model.1} parent=0 // pred_check_branch
    %1890 = sbr.rel (0) target = $region48
  $region47: #{character_language_model.1} parent=0 // pred_region
    _
  $region48: #{character_language_model.1} parent=0 // pred_fallthru
    _
  // Predicated region
  $region49: #{character_language_model.1} parent=0 // pred_check
    _
  $region50: #{character_language_model.1} parent=0 // pred_check_branch
    %1892 = sbr.rel (0) target = $region52
  $region51: #{character_language_model.1} parent=0 // pred_region
    _
  $region52: #{character_language_model.1} parent=0 // pred_fallthru
    _

</llo_original>
